<compile_context>
chip_gen: v5e
topology: v5e:2x2
jax: 0.10.0
libtpu: 0.0.40
codegen_flags: <defaults>
</compile_context>

<pallas_src>
import functools

import jax
import jax.numpy as jnp
from jax.experimental import pallas as pl
from jax.experimental.pallas import tpu as pltpu


# ----------------------------------------------------------------------------
# Helpers
# ----------------------------------------------------------------------------
def _choose_tile(dim, target, granule):
    """Largest multiple of `granule` <= target that evenly divides dim;
    fall back to the full dim (a full-dim block is always layout-legal)."""
    if dim <= target:
        return dim
    t = (min(target, dim) // granule) * granule
    while t >= granule:
        if dim % t == 0:
            return t
        t -= granule
    # TODO(synk): for huge non-granular dims (e.g. a 30522-wide vocab head),
    # switch to a pl.cdiv grid with edge masking instead of one full-dim block.
    return dim


def _vmem_limit_bytes(block_bytes):
    """Scoped-VMEM request derived from the actual (double-buffered) block bytes,
    with headroom, capped below the smallest physical VMEM (v7x: 64 MiB)."""
    return int(min(max(4 * block_bytes, 8 * 1024 * 1024), 64 * 1024 * 1024))


# ----------------------------------------------------------------------------
# Tiled linear:  o = act(x @ w + b)      (bf16 in, f32 accumulate, out_dtype out)
# ----------------------------------------------------------------------------
def _linear_kernel(x_ref, w_ref, b_ref, o_ref, acc_ref, *, act):
    @pl.when(pl.program_id(2) == 0)
    def _():
        acc_ref[...] = jnp.zeros_like(acc_ref)

    acc_ref[...] += jnp.dot(x_ref[...], w_ref[...],
                            preferred_element_type=jnp.float32)

    @pl.when(pl.program_id(2) == pl.num_programs(2) - 1)
    def _():
        y = acc_ref[...] + b_ref[...].astype(jnp.float32)
        if act == "relu":
            y = jnp.maximum(y, 0.0)
        elif act == "tanh":
            y = jnp.tanh(y)
        o_ref[...] = y.astype(o_ref.dtype)


def linear(x, w, b, act=None, out_dtype=jnp.bfloat16, *, tm=256, tn=256, tk=512):
    """x: (M, K), w: (K, N), b: (N,) f32 -> (M, N) out_dtype."""
    M, K = x.shape
    N = w.shape[1]
    tm = _choose_tile(M, tm, 8)
    tn = _choose_tile(N, tn, 128)
    tk = _choose_tile(K, tk, 128)
    grid = (M // tm, N // tn, K // tk)
    block_bytes = ((tm * tk * x.dtype.itemsize
                    + tk * tn * w.dtype.itemsize
                    + tn * 4
                    + tm * tn * jnp.dtype(out_dtype).itemsize) * 2
                   + tm * tn * 4)
    return pl.pallas_call(
        functools.partial(_linear_kernel, act=act),
        out_shape=jax.ShapeDtypeStruct((M, N), out_dtype),
        grid_spec=pltpu.PrefetchScalarGridSpec(
            num_scalar_prefetch=0,
            grid=grid,
            in_specs=[
                pl.BlockSpec((tm, tk), lambda i, j, k: (i, k)),
                pl.BlockSpec((tk, tn), lambda i, j, k: (k, j)),
                pl.BlockSpec((1, tn), lambda i, j, k: (0, j)),
            ],
            out_specs=pl.BlockSpec((tm, tn), lambda i, j, k: (i, j)),
            scratch_shapes=[pltpu.VMEM((tm, tn), jnp.float32)],
        ),
        compiler_params=pltpu.CompilerParams(
            dimension_semantics=("parallel", "parallel", "arbitrary"),
            vmem_limit_bytes=_vmem_limit_bytes(block_bytes),
        ),
    )(x, w, b.reshape(1, N))


# ----------------------------------------------------------------------------
# Tiled linear with residual-add + LayerNorm fused into the finalize step:
#   o = LayerNorm(residual + x @ w + b)
# ----------------------------------------------------------------------------
def _linear_addln_kernel(x_ref, w_ref, b_ref, r_ref, g_ref, bt_ref,
                         o_ref, acc_ref, *, eps):
    @pl.when(pl.program_id(1) == 0)
    def _():
        acc_ref[...] = jnp.zeros_like(acc_ref)

    acc_ref[...] += jnp.dot(x_ref[...], w_ref[...],
                            preferred_element_type=jnp.float32)

    @pl.when(pl.program_id(1) == pl.num_programs(1) - 1)
    def _():
        y = (acc_ref[...] + b_ref[...].astype(jnp.float32)
             + r_ref[...].astype(jnp.float32))
        mean = jnp.mean(y, axis=-1, keepdims=True)
        var = jnp.mean((y - mean) ** 2, axis=-1, keepdims=True)
        y = (y - mean) * jax.lax.rsqrt(var + eps)
        o_ref[...] = (y * g_ref[...].astype(jnp.float32)
                      + bt_ref[...].astype(jnp.float32)).astype(o_ref.dtype)


def linear_add_ln(x, w, b, residual, gamma, beta, eps,
                  out_dtype=jnp.bfloat16, *, tm=256, tk=512):
    """LayerNorm(residual + x @ w + b); add+LN ride in the matmul's finalize.

    Keeps the full output row (N) resident per tile (fine for D <= ~1024).
    # TODO(synk): for very large N, fall back to a tiled-N matmul + separate
    # add+LayerNorm kernel.
    """
    M, K = x.shape
    N = w.shape[1]
    tm = _choose_tile(M, tm, 8)
    tk = _choose_tile(K, tk, 128)
    grid = (M // tm, K // tk)
    block_bytes = ((tm * tk * x.dtype.itemsize
                    + tk * N * w.dtype.itemsize
                    + 3 * N * 4
                    + tm * N * residual.dtype.itemsize
                    + tm * N * jnp.dtype(out_dtype).itemsize) * 2
                   + tm * N * 4)
    return pl.pallas_call(
        functools.partial(_linear_addln_kernel, eps=eps),
        out_shape=jax.ShapeDtypeStruct((M, N), out_dtype),
        grid_spec=pltpu.PrefetchScalarGridSpec(
            num_scalar_prefetch=0,
            grid=grid,
            in_specs=[
                pl.BlockSpec((tm, tk), lambda i, k: (i, k)),
                pl.BlockSpec((tk, N), lambda i, k: (k, 0)),
                pl.BlockSpec((1, N), lambda i, k: (0, 0)),
                pl.BlockSpec((tm, N), lambda i, k: (i, 0)),
                pl.BlockSpec((1, N), lambda i, k: (0, 0)),
                pl.BlockSpec((1, N), lambda i, k: (0, 0)),
            ],
            out_specs=pl.BlockSpec((tm, N), lambda i, k: (i, 0)),
            scratch_shapes=[pltpu.VMEM((tm, N), jnp.float32)],
        ),
        compiler_params=pltpu.CompilerParams(
            dimension_semantics=("parallel", "arbitrary"),
            vmem_limit_bytes=_vmem_limit_bytes(block_bytes),
        ),
    )(x, w, b.reshape(1, N), residual, gamma.reshape(1, N), beta.reshape(1, N))


# ----------------------------------------------------------------------------
# Multi-head attention: (B, H//HP) grid, per-head-contiguous [q|k|v] columns
# ----------------------------------------------------------------------------
def _attention_kernel(qkv_ref, o_ref, *, HP, Dh, scale):
    # HP heads per grid step; HP <= 2 for real head dims (>=64): tiny unroll.
    for hp in range(HP):
        base = hp * 3 * Dh
        q = qkv_ref[:, base:base + Dh] * scale            # scale folded into q
        k = qkv_ref[:, base + Dh:base + 2 * Dh]
        v = qkv_ref[:, base + 2 * Dh:base + 3 * Dh]
        s = jax.lax.dot_general(q, k, (((1,), (1,)), ((), ())),
                                preferred_element_type=jnp.float32)
        m = jnp.max(s, axis=-1, keepdims=True)
        p = jnp.exp(s - m)
        p = p * pl.reciprocal(jnp.sum(p, axis=-1, keepdims=True), approx=True)
        out = jnp.dot(p.astype(v.dtype), v, preferred_element_type=jnp.float32)
        o_ref[:, hp * Dh:(hp + 1) * Dh] = out.astype(o_ref.dtype)
    # TODO(synk): for very long sequences switch to a KV-blocked online-softmax
    # (flash-style) grid; the full (S, S) scores are fine at small/medium S.


def attention(qkv, *, H):
    """qkv: (B, S, 3D) with per-head-contiguous [q|k|v] columns -> (B, S, D)."""
    B, S, D3 = qkv.shape
    D = D3 // 3
    Dh = D // H
    HP = max(1, min(H, 128 // max(Dh, 1)))   # pair heads to >=128 output lanes
    while H % HP:
        HP -= 1
    scale = 1.0 / float(Dh) ** 0.5
    return pl.pallas_call(
        functools.partial(_attention_kernel, HP=HP, Dh=Dh, scale=scale),
        out_shape=jax.ShapeDtypeStruct((B, S, D), qkv.dtype),
        grid=(B, H // HP),
        in_specs=[pl.BlockSpec((None, S, HP * 3 * Dh), lambda b, h: (b, 0, h))],
        out_specs=pl.BlockSpec((None, S, HP * Dh), lambda b, h: (b, 0, h)),
        compiler_params=pltpu.CompilerParams(
            dimension_semantics=("parallel", "parallel")),
    )(qkv)


# ----------------------------------------------------------------------------
# Parameters (weights bf16 for MXU/HBM efficiency, biases/LayerNorm f32)
# ----------------------------------------------------------------------------
def init_params(key, *, token_size, num_layers, D, H, hidden,
                param_dtype=jnp.bfloat16):
    Dh = D // H

    def dense(k, fan_in, fan_out):
        std = 1.0 / float(fan_in) ** 0.5
        w = jax.random.normal(k, (fan_in, fan_out), jnp.float32) * std
        return {"w": w.astype(param_dtype), "b": jnp.zeros((fan_out,), jnp.float32)}

    def fuse_qkv(wq, wk, wv):
        # Reorder columns so each head's [q|k|v] (3*Dh cols) is contiguous.
        def per_head(m):
            return m.reshape(D, H, Dh)
        w = jnp.concatenate([per_head(wq["w"]), per_head(wk["w"]),
                             per_head(wv["w"])], axis=2).reshape(D, 3 * D)
        b = jnp.concatenate([wq["b"].reshape(H, Dh), wk["b"].reshape(H, Dh),
                             wv["b"].reshape(H, Dh)], axis=1).reshape(3 * D)
        return {"w": w, "b": b}

    keys = jax.random.split(key, num_layers * 8 + 2)
    layers = []
    for i in range(num_layers):
        k = keys[i * 8:(i + 1) * 8]
        layers.append({
            "wqkv": fuse_qkv(dense(k[0], D, D), dense(k[1], D, D), dense(k[2], D, D)),
            "wo": dense(k[3], D, D),
            "ffn1": dense(k[4], D, hidden), "ffn2": dense(k[5], hidden, D),
            "ln1_g": jnp.ones((D,), jnp.float32), "ln1_b": jnp.zeros((D,), jnp.float32),
            "ln2_g": jnp.ones((D,), jnp.float32), "ln2_b": jnp.zeros((D,), jnp.float32),
        })
    cls = dense(keys[-2], D, D)
    out = dense(keys[-1], D, token_size)
    return {"layers": layers, "cls": cls, "out": out}


# ----------------------------------------------------------------------------
# Forward pass (plain-JAX glue composing the Pallas kernels)
# ----------------------------------------------------------------------------
def encoder_layer(x2d, p, *, B, S, H, eps, act_dt):
    D = x2d.shape[1]

    # Fused QKV projection: one tiled matmul, x read once; bf16 activations out.
    qkv = linear(x2d, p["wqkv"]["w"], p["wqkv"]["b"], out_dtype=act_dt)   # (M, 3D)
    attn = attention(qkv.reshape(B, S, 3 * D), H=H).reshape(B * S, D)     # (M, D)

    # wo projection with residual-add + LayerNorm fused into its finalize.
    x2d = linear_add_ln(attn, p["wo"]["w"], p["wo"]["b"],
                        x2d, p["ln1_g"], p["ln1_b"], eps, out_dtype=act_dt)

    # FFN: Linear -> ReLU (fused) -> Linear with residual+LN fused.
    h = linear(x2d, p["ffn1"]["w"], p["ffn1"]["b"], act="relu", out_dtype=act_dt)
    x2d = linear_add_ln(h, p["ffn2"]["w"], p["ffn2"]["b"],
                        x2d, p["ln2_g"], p["ln2_b"], eps, out_dtype=act_dt)
    return x2d


def bert_forward(params, x, *, H, eps):
    """x: (B, S, D) float32 -> logits (B, S, token_size) float32."""
    B, S, D = x.shape
    act_dt = jnp.bfloat16                      # bf16 inter-kernel activations
    x2d = x.reshape(B * S, D).astype(act_dt)
    for lp in params["layers"]:
        x2d = encoder_layer(x2d, lp, B=B, S=S, H=H, eps=eps, act_dt=act_dt)
    x2d = linear(x2d, params["cls"]["w"], params["cls"]["b"],
                 act="tanh", out_dtype=act_dt)
    logits = linear(x2d, params["out"]["w"], params["out"]["b"],
                    out_dtype=jnp.float32)
    return logits.reshape(B, S, -1)


# ----------------------------------------------------------------------------
if __name__ == "__main__":
    B, S, D = 2, 8, 32
    H = 4
    HIDDEN = 64
    NUM_LAYERS = 2
    TOKEN_SIZE = 48
    EPS = 0.1

    root = jax.random.PRNGKey(0)
    k_in, k_par = jax.random.split(root)

    x = jax.random.normal(k_in, (B, S, D), jnp.float32)
    params = init_params(k_par, token_size=TOKEN_SIZE, num_layers=NUM_LAYERS,
                         D=D, H=H, hidden=HIDDEN)

    fwd = jax.jit(functools.partial(bert_forward, H=H, eps=EPS))
    out = fwd(params, x)
    jax.block_until_ready(out)

    assert out.shape == (B, S, TOKEN_SIZE), out.shape
    assert out.dtype == jnp.float32
    print("KERNEL_OK")
</pallas_src>

<mosaic_0001>
module attributes {stable_mosaic.version = 11 : i64} {
  func.func @_linear_kernel(%arg0: i32, %arg1: i32, %arg2: i32, %arg3: memref<16x32xbf16, #tpu.memory_space<vmem>>, %arg4: memref<32x96xbf16, #tpu.memory_space<vmem>>, %arg5: memref<1x96xf32, #tpu.memory_space<vmem>>, %arg6: memref<16x96xbf16, #tpu.memory_space<vmem>>, %arg7: memref<16x96xf32, #tpu.memory_space<vmem>>) attributes {dimension_semantics = [#tpu.dimension_semantics<parallel>, #tpu.dimension_semantics<parallel>, #tpu.dimension_semantics<arbitrary>], iteration_bounds = array<i64: 1, 1, 1>, scalar_prefetch = 0 : i64, scratch_operands = 1 : i64, tpu.core_type = #tpu.core_type<tc>, window_params = [{transform_indices = @transform_0, window_bounds = array<i64: 16, 32>}, {transform_indices = @transform_1, window_bounds = array<i64: 32, 96>}, {transform_indices = @transform_2, window_bounds = array<i64: 1, 96>}, {transform_indices = @transform_3, window_bounds = array<i64: 16, 96>}]} {
    %c0_i32 = arith.constant 0 : i32
    %0 = arith.cmpi eq, %arg2, %c0_i32 : i32
    %1 = arith.extui %0 : i1 to i32
    %c0_i32_0 = arith.constant 0 : i32
    %2 = arith.cmpi ne, %1, %c0_i32_0 : i32
    scf.if %2 {
      %cst_10 = arith.constant 0.000000e+00 : f32
      %12 = vector.broadcast %cst_10 : f32 to vector<16x96xf32>
      %c0_11 = arith.constant 0 : index
      %c0_12 = arith.constant 0 : index
      %13 = vector.load %arg7[%c0_11, %c0_12] : memref<16x96xf32, #tpu.memory_space<vmem>>, vector<16x96xf32>
      tpu.vector_store %arg7[%c0_11, %c0_12], %12 {strides = array<i32>} : memref<16x96xf32, #tpu.memory_space<vmem>>, vector<16x96xf32>,
    } else {
    }
    %c0 = arith.constant 0 : index
    %c0_1 = arith.constant 0 : index
    %3 = vector.load %arg7[%c0, %c0_1] : memref<16x96xf32, #tpu.memory_space<vmem>>, vector<16x96xf32>
    %c0_2 = arith.constant 0 : index
    %c0_3 = arith.constant 0 : index
    %4 = vector.load %arg3[%c0_2, %c0_3] : memref<16x32xbf16, #tpu.memory_space<vmem>>, vector<16x32xbf16>
    %c0_4 = arith.constant 0 : index
    %c0_5 = arith.constant 0 : index
    %5 = vector.load %arg4[%c0_4, %c0_5] : memref<32x96xbf16, #tpu.memory_space<vmem>>, vector<32x96xbf16>
    %cst = arith.constant dense<0.000000e+00> : vector<16x96xf32>
    %6 = tpu.matmul %4, %5, %cst {dimension_numbers = #tpu.dot_dimension_numbers<[1], [0], [0], [1], [0, 0, 1, 1], [], []>} : vector<16x32xbf16>, vector<32x96xbf16>, vector<16x96xf32> -> vector<16x96xf32>
    %7 = arith.addf %3, %6 : vector<16x96xf32>
    %c0_6 = arith.constant 0 : index
    %c0_7 = arith.constant 0 : index
    %8 = vector.load %arg7[%c0_6, %c0_7] : memref<16x96xf32, #tpu.memory_space<vmem>>, vector<16x96xf32>
    tpu.vector_store %arg7[%c0_6, %c0_7], %7 {strides = array<i32>} : memref<16x96xf32, #tpu.memory_space<vmem>>, vector<16x96xf32>,
    %c0_i32_8 = arith.constant 0 : i32
    %9 = arith.cmpi eq, %arg2, %c0_i32_8 : i32
    %10 = arith.extui %9 : i1 to i32
    %c0_i32_9 = arith.constant 0 : i32
    %11 = arith.cmpi ne, %10, %c0_i32_9 : i32
    scf.if %11 {
      %c0_10 = arith.constant 0 : index
      %c0_11 = arith.constant 0 : index
      %12 = vector.load %arg7[%c0_10, %c0_11] : memref<16x96xf32, #tpu.memory_space<vmem>>, vector<16x96xf32>
      %c0_12 = arith.constant 0 : index
      %c0_13 = arith.constant 0 : index
      %13 = vector.load %arg5[%c0_12, %c0_13] : memref<1x96xf32, #tpu.memory_space<vmem>>, vector<1x96xf32>
      %14 = vector.broadcast %13 : vector<1x96xf32> to vector<16x96xf32>
      %15 = arith.addf %12, %14 : vector<16x96xf32>
      %16 = arith.truncf %15 : vector<16x96xf32> to vector<16x96xbf16>
      %c0_14 = arith.constant 0 : index
      %c0_15 = arith.constant 0 : index
      %17 = vector.load %arg6[%c0_14, %c0_15] : memref<16x96xbf16, #tpu.memory_space<vmem>>, vector<16x96xbf16>
      tpu.vector_store %arg6[%c0_14, %c0_15], %16 {strides = array<i32>} : memref<16x96xbf16, #tpu.memory_space<vmem>>, vector<16x96xbf16>,
    } else {
    }
    return
  }
  func.func @transform_0(%arg0: i32, %arg1: i32, %arg2: i32) -> (i32, i32) {
    %c0_i32 = arith.constant 0 : i32
    return %arg0, %arg2 : i32, i32
  }
  func.func @transform_1(%arg0: i32, %arg1: i32, %arg2: i32) -> (i32, i32) {
    %c0_i32 = arith.constant 0 : i32
    return %arg2, %arg1 : i32, i32
  }
  func.func @transform_2(%arg0: i32, %arg1: i32, %arg2: i32) -> (i32, i32) {
    %c0_i32 = arith.constant 0 : i32
    %c0_i32_0 = arith.constant 0 : i32
    return %c0_i32, %arg1 : i32, i32
  }
  func.func @transform_3(%arg0: i32, %arg1: i32, %arg2: i32) -> (i32, i32) {
    %c0_i32 = arith.constant 0 : i32
    return %arg0, %arg1 : i32, i32
  }
}

module attributes {stable_mosaic.version = 11 : i64} {
  func.func @_linear_addln_kernel(%arg0: i32, %arg1: i32, %arg2: memref<16x32xbf16, #tpu.memory_space<vmem>>, %arg3: memref<32x32xbf16, #tpu.memory_space<vmem>>, %arg4: memref<1x32xf32, #tpu.memory_space<vmem>>, %arg5: memref<16x32xbf16, #tpu.memory_space<vmem>>, %arg6: memref<1x32xf32, #tpu.memory_space<vmem>>, %arg7: memref<1x32xf32, #tpu.memory_space<vmem>>, %arg8: memref<16x32xbf16, #tpu.memory_space<vmem>>, %arg9: memref<16x32xf32, #tpu.memory_space<vmem>>) attributes {dimension_semantics = [#tpu.dimension_semantics<parallel>, #tpu.dimension_semantics<arbitrary>], iteration_bounds = array<i64: 1, 1>, scalar_prefetch = 0 : i64, scratch_operands = 1 : i64, tpu.core_type = #tpu.core_type<tc>, window_params = [{transform_indices = @transform_0, window_bounds = array<i64: 16, 32>}, {transform_indices = @transform_1, window_bounds = array<i64: 32, 32>}, {pipeline_mode = #tpu.pipeline_mode<synchronous>, transform_indices = @transform_2, window_bounds = array<i64: 1, 32>}, {transform_indices = @transform_3, window_bounds = array<i64: 16, 32>}, {pipeline_mode = #tpu.pipeline_mode<synchronous>, transform_indices = @transform_4, window_bounds = array<i64: 1, 32>}, {pipeline_mode = #tpu.pipeline_mode<synchronous>, transform_indices = @transform_5, window_bounds = array<i64: 1, 32>}, {transform_indices = @transform_6, window_bounds = array<i64: 16, 32>}]} {
    %c0_i32 = arith.constant 0 : i32
    %0 = arith.cmpi eq, %arg1, %c0_i32 : i32
    %1 = arith.extui %0 : i1 to i32
    %c0_i32_0 = arith.constant 0 : i32
    %2 = arith.cmpi ne, %1, %c0_i32_0 : i32
    scf.if %2 {
      %cst_10 = arith.constant 0.000000e+00 : f32
      %12 = vector.broadcast %cst_10 : f32 to vector<16x32xf32>
      %c0_11 = arith.constant 0 : index
      %c0_12 = arith.constant 0 : index
      %13 = vector.load %arg9[%c0_11, %c0_12] : memref<16x32xf32, #tpu.memory_space<vmem>>, vector<16x32xf32>
      tpu.vector_store %arg9[%c0_11, %c0_12], %12 {strides = array<i32>} : memref<16x32xf32, #tpu.memory_space<vmem>>, vector<16x32xf32>,
    } else {
    }
    %c0 = arith.constant 0 : index
    %c0_1 = arith.constant 0 : index
    %3 = vector.load %arg9[%c0, %c0_1] : memref<16x32xf32, #tpu.memory_space<vmem>>, vector<16x32xf32>
    %c0_2 = arith.constant 0 : index
    %c0_3 = arith.constant 0 : index
    %4 = vector.load %arg2[%c0_2, %c0_3] : memref<16x32xbf16, #tpu.memory_space<vmem>>, vector<16x32xbf16>
    %c0_4 = arith.constant 0 : index
    %c0_5 = arith.constant 0 : index
    %5 = vector.load %arg3[%c0_4, %c0_5] : memref<32x32xbf16, #tpu.memory_space<vmem>>, vector<32x32xbf16>
    %cst = arith.constant dense<0.000000e+00> : vector<16x32xf32>
    %6 = tpu.matmul %4, %5, %cst {dimension_numbers = #tpu.dot_dimension_numbers<[1], [0], [0], [1], [0, 0, 1, 1], [], []>} : vector<16x32xbf16>, vector<32x32xbf16>, vector<16x32xf32> -> vector<16x32xf32>
    %7 = arith.addf %3, %6 : vector<16x32xf32>
    %c0_6 = arith.constant 0 : index
    %c0_7 = arith.constant 0 : index
    %8 = vector.load %arg9[%c0_6, %c0_7] : memref<16x32xf32, #tpu.memory_space<vmem>>, vector<16x32xf32>
    tpu.vector_store %arg9[%c0_6, %c0_7], %7 {strides = array<i32>} : memref<16x32xf32, #tpu.memory_space<vmem>>, vector<16x32xf32>,
    %c0_i32_8 = arith.constant 0 : i32
    %9 = arith.cmpi eq, %arg1, %c0_i32_8 : i32
    %10 = arith.extui %9 : i1 to i32
    %c0_i32_9 = arith.constant 0 : i32
    %11 = arith.cmpi ne, %10, %c0_i32_9 : i32
    scf.if %11 {
      %c0_10 = arith.constant 0 : index
      %c0_11 = arith.constant 0 : index
      %12 = vector.load %arg9[%c0_10, %c0_11] : memref<16x32xf32, #tpu.memory_space<vmem>>, vector<16x32xf32>
      %c0_12 = arith.constant 0 : index
      %c0_13 = arith.constant 0 : index
      %13 = vector.load %arg4[%c0_12, %c0_13] : memref<1x32xf32, #tpu.memory_space<vmem>>, vector<1x32xf32>
      %14 = vector.broadcast %13 : vector<1x32xf32> to vector<16x32xf32>
      %15 = arith.addf %12, %14 : vector<16x32xf32>
      %c0_14 = arith.constant 0 : index
      %c0_15 = arith.constant 0 : index
      %16 = vector.load %arg5[%c0_14, %c0_15] : memref<16x32xbf16, #tpu.memory_space<vmem>>, vector<16x32xbf16>
      %17 = arith.extf %16 : vector<16x32xbf16> to vector<16x32xf32>
      %18 = arith.addf %15, %17 : vector<16x32xf32>
      %cst_16 = arith.constant dense<0.000000e+00> : vector<16xf32>
      %19 = vector.multi_reduction <add>, %18, %cst_16 [1] : vector<16x32xf32> to vector<16xf32>
      %20 = vector.shape_cast %19 : vector<16xf32> to vector<16x1xf32>
      %cst_17 = arith.constant 3.200000e+01 : f32
      %21 = vector.broadcast %cst_17 : f32 to vector<16x1xf32>
      %22 = arith.divf %20, %21 : vector<16x1xf32>
      %23 = vector.broadcast %22 : vector<16x1xf32> to vector<16x32xf32>
      %24 = arith.subf %18, %23 : vector<16x32xf32>
      %25 = arith.mulf %24, %24 : vector<16x32xf32>
      %cst_18 = arith.constant dense<0.000000e+00> : vector<16xf32>
      %26 = vector.multi_reduction <add>, %25, %cst_18 [1] : vector<16x32xf32> to vector<16xf32>
      %27 = vector.shape_cast %26 : vector<16xf32> to vector<16x1xf32>
      %cst_19 = arith.constant 3.200000e+01 : f32
      %28 = vector.broadcast %cst_19 : f32 to vector<16x1xf32>
      %29 = arith.divf %27, %28 : vector<16x1xf32>
      %30 = vector.broadcast %22 : vector<16x1xf32> to vector<16x32xf32>
      %31 = arith.subf %18, %30 : vector<16x32xf32>
      %cst_20 = arith.constant 1.000000e-01 : f32
      %32 = vector.broadcast %cst_20 : f32 to vector<16x1xf32>
      %33 = arith.addf %29, %32 : vector<16x1xf32>
      %34 = math.rsqrt %33 : vector<16x1xf32>
      %35 = vector.broadcast %34 : vector<16x1xf32> to vector<16x32xf32>
      %36 = arith.mulf %31, %35 : vector<16x32xf32>
      %c0_21 = arith.constant 0 : index
      %c0_22 = arith.constant 0 : index
      %37 = vector.load %arg6[%c0_21, %c0_22] : memref<1x32xf32, #tpu.memory_space<vmem>>, vector<1x32xf32>
      %38 = vector.broadcast %37 : vector<1x32xf32> to vector<16x32xf32>
      %39 = arith.mulf %36, %38 : vector<16x32xf32>
      %c0_23 = arith.constant 0 : index
      %c0_24 = arith.constant 0 : index
      %40 = vector.load %arg7[%c0_23, %c0_24] : memref<1x32xf32, #tpu.memory_space<vmem>>, vector<1x32xf32>
      %41 = vector.broadcast %40 : vector<1x32xf32> to vector<16x32xf32>
      %42 = arith.addf %39, %41 : vector<16x32xf32>
      %43 = arith.truncf %42 : vector<16x32xf32> to vector<16x32xbf16>
      %c0_25 = arith.constant 0 : index
      %c0_26 = arith.constant 0 : index
      %44 = vector.load %arg8[%c0_25, %c0_26] : memref<16x32xbf16, #tpu.memory_space<vmem>>, vector<16x32xbf16>
      tpu.vector_store %arg8[%c0_25, %c0_26], %43 {strides = array<i32>} : memref<16x32xbf16, #tpu.memory_space<vmem>>, vector<16x32xbf16>,
    } else {
    }
    return
  }
  func.func @transform_0(%arg0: i32, %arg1: i32) -> (i32, i32) {
    %c0_i32 = arith.constant 0 : i32
    return %arg0, %arg1 : i32, i32
  }
  func.func @transform_1(%arg0: i32, %arg1: i32) -> (i32, i32) {
    %c0_i32 = arith.constant 0 : i32
    %c0_i32_0 = arith.constant 0 : i32
    return %arg1, %c0_i32 : i32, i32
  }
  func.func @transform_2(%arg0: i32, %arg1: i32) -> (i32, i32) {
    %c0_i32 = arith.constant 0 : i32
    %c0_i32_0 = arith.constant 0 : i32
    %c0_i32_1 = arith.constant 0 : i32
    return %c0_i32, %c0_i32_0 : i32, i32
  }
  func.func @transform_3(%arg0: i32, %arg1: i32) -> (i32, i32) {
    %c0_i32 = arith.constant 0 : i32
    %c0_i32_0 = arith.constant 0 : i32
    return %arg0, %c0_i32 : i32, i32
  }
  func.func @transform_4(%arg0: i32, %arg1: i32) -> (i32, i32) {
    %c0_i32 = arith.constant 0 : i32
    %c0_i32_0 = arith.constant 0 : i32
    %c0_i32_1 = arith.constant 0 : i32
    return %c0_i32, %c0_i32_0 : i32, i32
  }
  func.func @transform_5(%arg0: i32, %arg1: i32) -> (i32, i32) {
    %c0_i32 = arith.constant 0 : i32
    %c0_i32_0 = arith.constant 0 : i32
    %c0_i32_1 = arith.constant 0 : i32
    return %c0_i32, %c0_i32_0 : i32, i32
  }
  func.func @transform_6(%arg0: i32, %arg1: i32) -> (i32, i32) {
    %c0_i32 = arith.constant 0 : i32
    %c0_i32_0 = arith.constant 0 : i32
    return %arg0, %c0_i32 : i32, i32
  }
}

module attributes {stable_mosaic.version = 11 : i64} {
  func.func @_attention_kernel(%arg0: i32, %arg1: i32, %arg2: memref<1x8x96xbf16, #tpu.memory_space<vmem>>, %arg3: memref<1x8x32xbf16, #tpu.memory_space<vmem>>) attributes {dimension_semantics = [#tpu.dimension_semantics<parallel>, #tpu.dimension_semantics<parallel>], iteration_bounds = array<i64: 2, 1>, scalar_prefetch = 0 : i64, scratch_operands = 0 : i64, tpu.core_type = #tpu.core_type<tc>, window_params = [{transform_indices = @transform_0, window_bounds = array<i64: 1, 8, 96>}, {transform_indices = @transform_1, window_bounds = array<i64: 1, 8, 32>}]} {
    %c0 = arith.constant 0 : index
    %c0_0 = arith.constant 0 : index
    %c0_1 = arith.constant 0 : index
    %0 = vector.load %arg2[%c0, %c0_0, %c0_1] : memref<1x8x96xbf16, #tpu.memory_space<vmem>>, vector<1x8x8xbf16>
    %1 = vector.shape_cast %0 : vector<1x8x8xbf16> to vector<8x8xbf16>
    %cst = arith.constant 3.535160e-01 : bf16
    %2 = vector.broadcast %cst : bf16 to vector<8x8xbf16>
    %3 = arith.mulf %1, %2 : vector<8x8xbf16>
    %c0_2 = arith.constant 0 : index
    %c0_3 = arith.constant 0 : index
    %c8 = arith.constant 8 : index
    %4 = vector.load %arg2[%c0_2, %c0_3, %c8] : memref<1x8x96xbf16, #tpu.memory_space<vmem>>, vector<1x8x8xbf16>
    %5 = vector.shape_cast %4 : vector<1x8x8xbf16> to vector<8x8xbf16>
    %c0_4 = arith.constant 0 : index
    %c0_5 = arith.constant 0 : index
    %c16 = arith.constant 16 : index
    %6 = vector.load %arg2[%c0_4, %c0_5, %c16] : memref<1x8x96xbf16, #tpu.memory_space<vmem>>, vector<1x8x8xbf16>
    %7 = vector.shape_cast %6 : vector<1x8x8xbf16> to vector<8x8xbf16>
    %cst_6 = arith.constant dense<0.000000e+00> : vector<8x8xf32>
    %8 = tpu.matmul %3, %5, %cst_6 {dimension_numbers = #tpu.dot_dimension_numbers<[1], [1], [0], [0], [0, 0, 1, 0], [], []>} : vector<8x8xbf16>, vector<8x8xbf16>, vector<8x8xf32> -> vector<8x8xf32>
    %cst_7 = arith.constant dense<0xFF800000> : vector<8xf32>
    %9 = vector.multi_reduction <maximumf>, %8, %cst_7 [1] : vector<8x8xf32> to vector<8xf32>
    %10 = vector.shape_cast %9 : vector<8xf32> to vector<8x1xf32>
    %11 = vector.broadcast %10 : vector<8x1xf32> to vector<8x8xf32>
    %12 = arith.subf %8, %11 : vector<8x8xf32>
    %13 = math.exp %12 : vector<8x8xf32>
    %cst_8 = arith.constant dense<0.000000e+00> : vector<8xf32>
    %14 = vector.multi_reduction <add>, %13, %cst_8 [1] : vector<8x8xf32> to vector<8xf32>
    %15 = vector.shape_cast %14 : vector<8xf32> to vector<8x1xf32>
    %16 = tpu.reciprocal %15 {approx = true} : vector<8x1xf32> -> vector<8x1xf32>
    %17 = vector.broadcast %16 : vector<8x1xf32> to vector<8x8xf32>
    %18 = arith.mulf %13, %17 : vector<8x8xf32>
    %19 = arith.truncf %18 : vector<8x8xf32> to vector<8x8xbf16>
    %cst_9 = arith.constant dense<0.000000e+00> : vector<8x8xf32>
    %20 = tpu.matmul %19, %7, %cst_9 {dimension_numbers = #tpu.dot_dimension_numbers<[1], [0], [0], [1], [0, 0, 1, 1], [], []>} : vector<8x8xbf16>, vector<8x8xbf16>, vector<8x8xf32> -> vector<8x8xf32>
    %21 = arith.truncf %20 : vector<8x8xf32> to vector<8x8xbf16>
    %c0_10 = arith.constant 0 : index
    %c0_11 = arith.constant 0 : index
    %c0_12 = arith.constant 0 : index
    %22 = vector.load %arg3[%c0_10, %c0_11, %c0_12] : memref<1x8x32xbf16, #tpu.memory_space<vmem>>, vector<1x8x8xbf16>
    %23 = vector.shape_cast %22 : vector<1x8x8xbf16> to vector<8x8xbf16>
    %24 = vector.shape_cast %21 : vector<8x8xbf16> to vector<1x8x8xbf16>
    tpu.vector_store %arg3[%c0_10, %c0_11, %c0_12], %24 {strides = array<i32>} : memref<1x8x32xbf16, #tpu.memory_space<vmem>>, vector<1x8x8xbf16>,
    %c0_13 = arith.constant 0 : index
    %c0_14 = arith.constant 0 : index
    %c24 = arith.constant 24 : index
    %25 = vector.load %arg2[%c0_13, %c0_14, %c24] : memref<1x8x96xbf16, #tpu.memory_space<vmem>>, vector<1x8x8xbf16>
    %26 = vector.shape_cast %25 : vector<1x8x8xbf16> to vector<8x8xbf16>
    %cst_15 = arith.constant 3.535160e-01 : bf16
    %27 = vector.broadcast %cst_15 : bf16 to vector<8x8xbf16>
    %28 = arith.mulf %26, %27 : vector<8x8xbf16>
    %c0_16 = arith.constant 0 : index
    %c0_17 = arith.constant 0 : index
    %c32 = arith.constant 32 : index
    %29 = vector.load %arg2[%c0_16, %c0_17, %c32] : memref<1x8x96xbf16, #tpu.memory_space<vmem>>, vector<1x8x8xbf16>
    %30 = vector.shape_cast %29 : vector<1x8x8xbf16> to vector<8x8xbf16>
    %c0_18 = arith.constant 0 : index
    %c0_19 = arith.constant 0 : index
    %c40 = arith.constant 40 : index
    %31 = vector.load %arg2[%c0_18, %c0_19, %c40] : memref<1x8x96xbf16, #tpu.memory_space<vmem>>, vector<1x8x8xbf16>
    %32 = vector.shape_cast %31 : vector<1x8x8xbf16> to vector<8x8xbf16>
    %cst_20 = arith.constant dense<0.000000e+00> : vector<8x8xf32>
    %33 = tpu.matmul %28, %30, %cst_20 {dimension_numbers = #tpu.dot_dimension_numbers<[1], [1], [0], [0], [0, 0, 1, 0], [], []>} : vector<8x8xbf16>, vector<8x8xbf16>, vector<8x8xf32> -> vector<8x8xf32>
    %cst_21 = arith.constant dense<0xFF800000> : vector<8xf32>
    %34 = vector.multi_reduction <maximumf>, %33, %cst_21 [1] : vector<8x8xf32> to vector<8xf32>
    %35 = vector.shape_cast %34 : vector<8xf32> to vector<8x1xf32>
    %36 = vector.broadcast %35 : vector<8x1xf32> to vector<8x8xf32>
    %37 = arith.subf %33, %36 : vector<8x8xf32>
    %38 = math.exp %37 : vector<8x8xf32>
    %cst_22 = arith.constant dense<0.000000e+00> : vector<8xf32>
    %39 = vector.multi_reduction <add>, %38, %cst_22 [1] : vector<8x8xf32> to vector<8xf32>
    %40 = vector.shape_cast %39 : vector<8xf32> to vector<8x1xf32>
    %41 = tpu.reciprocal %40 {approx = true} : vector<8x1xf32> -> vector<8x1xf32>
    %42 = vector.broadcast %41 : vector<8x1xf32> to vector<8x8xf32>
    %43 = arith.mulf %38, %42 : vector<8x8xf32>
    %44 = arith.truncf %43 : vector<8x8xf32> to vector<8x8xbf16>
    %cst_23 = arith.constant dense<0.000000e+00> : vector<8x8xf32>
    %45 = tpu.matmul %44, %32, %cst_23 {dimension_numbers = #tpu.dot_dimension_numbers<[1], [0], [0], [1], [0, 0, 1, 1], [], []>} : vector<8x8xbf16>, vector<8x8xbf16>, vector<8x8xf32> -> vector<8x8xf32>
    %46 = arith.truncf %45 : vector<8x8xf32> to vector<8x8xbf16>
    %c0_24 = arith.constant 0 : index
    %c0_25 = arith.constant 0 : index
    %c8_26 = arith.constant 8 : index
    %47 = vector.load %arg3[%c0_24, %c0_25, %c8_26] : memref<1x8x32xbf16, #tpu.memory_space<vmem>>, vector<1x8x8xbf16>
    %48 = vector.shape_cast %47 : vector<1x8x8xbf16> to vector<8x8xbf16>
    %49 = vector.shape_cast %46 : vector<8x8xbf16> to vector<1x8x8xbf16>
    tpu.vector_store %arg3[%c0_24, %c0_25, %c8_26], %49 {strides = array<i32>} : memref<1x8x32xbf16, #tpu.memory_space<vmem>>, vector<1x8x8xbf16>,
    %c0_27 = arith.constant 0 : index
    %c0_28 = arith.constant 0 : index
    %c48 = arith.constant 48 : index
    %50 = vector.load %arg2[%c0_27, %c0_28, %c48] : memref<1x8x96xbf16, #tpu.memory_space<vmem>>, vector<1x8x8xbf16>
    %51 = vector.shape_cast %50 : vector<1x8x8xbf16> to vector<8x8xbf16>
    %cst_29 = arith.constant 3.535160e-01 : bf16
    %52 = vector.broadcast %cst_29 : bf16 to vector<8x8xbf16>
    %53 = arith.mulf %51, %52 : vector<8x8xbf16>
    %c0_30 = arith.constant 0 : index
    %c0_31 = arith.constant 0 : index
    %c56 = arith.constant 56 : index
    %54 = vector.load %arg2[%c0_30, %c0_31, %c56] : memref<1x8x96xbf16, #tpu.memory_space<vmem>>, vector<1x8x8xbf16>
    %55 = vector.shape_cast %54 : vector<1x8x8xbf16> to vector<8x8xbf16>
    %c0_32 = arith.constant 0 : index
    %c0_33 = arith.constant 0 : index
    %c64 = arith.constant 64 : index
    %56 = vector.load %arg2[%c0_32, %c0_33, %c64] : memref<1x8x96xbf16, #tpu.memory_space<vmem>>, vector<1x8x8xbf16>
    %57 = vector.shape_cast %56 : vector<1x8x8xbf16> to vector<8x8xbf16>
    %cst_34 = arith.constant dense<0.000000e+00> : vector<8x8xf32>
    %58 = tpu.matmul %53, %55, %cst_34 {dimension_numbers = #tpu.dot_dimension_numbers<[1], [1], [0], [0], [0, 0, 1, 0], [], []>} : vector<8x8xbf16>, vector<8x8xbf16>, vector<8x8xf32> -> vector<8x8xf32>
    %cst_35 = arith.constant dense<0xFF800000> : vector<8xf32>
    %59 = vector.multi_reduction <maximumf>, %58, %cst_35 [1] : vector<8x8xf32> to vector<8xf32>
    %60 = vector.shape_cast %59 : vector<8xf32> to vector<8x1xf32>
    %61 = vector.broadcast %60 : vector<8x1xf32> to vector<8x8xf32>
    %62 = arith.subf %58, %61 : vector<8x8xf32>
    %63 = math.exp %62 : vector<8x8xf32>
    %cst_36 = arith.constant dense<0.000000e+00> : vector<8xf32>
    %64 = vector.multi_reduction <add>, %63, %cst_36 [1] : vector<8x8xf32> to vector<8xf32>
    %65 = vector.shape_cast %64 : vector<8xf32> to vector<8x1xf32>
    %66 = tpu.reciprocal %65 {approx = true} : vector<8x1xf32> -> vector<8x1xf32>
    %67 = vector.broadcast %66 : vector<8x1xf32> to vector<8x8xf32>
    %68 = arith.mulf %63, %67 : vector<8x8xf32>
    %69 = arith.truncf %68 : vector<8x8xf32> to vector<8x8xbf16>
    %cst_37 = arith.constant dense<0.000000e+00> : vector<8x8xf32>
    %70 = tpu.matmul %69, %57, %cst_37 {dimension_numbers = #tpu.dot_dimension_numbers<[1], [0], [0], [1], [0, 0, 1, 1], [], []>} : vector<8x8xbf16>, vector<8x8xbf16>, vector<8x8xf32> -> vector<8x8xf32>
    %71 = arith.truncf %70 : vector<8x8xf32> to vector<8x8xbf16>
    %c0_38 = arith.constant 0 : index
    %c0_39 = arith.constant 0 : index
    %c16_40 = arith.constant 16 : index
    %72 = vector.load %arg3[%c0_38, %c0_39, %c16_40] : memref<1x8x32xbf16, #tpu.memory_space<vmem>>, vector<1x8x8xbf16>
    %73 = vector.shape_cast %72 : vector<1x8x8xbf16> to vector<8x8xbf16>
    %74 = vector.shape_cast %71 : vector<8x8xbf16> to vector<1x8x8xbf16>
    tpu.vector_store %arg3[%c0_38, %c0_39, %c16_40], %74 {strides = array<i32>} : memref<1x8x32xbf16, #tpu.memory_space<vmem>>, vector<1x8x8xbf16>,
    %c0_41 = arith.constant 0 : index
    %c0_42 = arith.constant 0 : index
    %c72 = arith.constant 72 : index
    %75 = vector.load %arg2[%c0_41, %c0_42, %c72] : memref<1x8x96xbf16, #tpu.memory_space<vmem>>, vector<1x8x8xbf16>
    %76 = vector.shape_cast %75 : vector<1x8x8xbf16> to vector<8x8xbf16>
    %cst_43 = arith.constant 3.535160e-01 : bf16
    %77 = vector.broadcast %cst_43 : bf16 to vector<8x8xbf16>
    %78 = arith.mulf %76, %77 : vector<8x8xbf16>
    %c0_44 = arith.constant 0 : index
    %c0_45 = arith.constant 0 : index
    %c80 = arith.constant 80 : index
    %79 = vector.load %arg2[%c0_44, %c0_45, %c80] : memref<1x8x96xbf16, #tpu.memory_space<vmem>>, vector<1x8x8xbf16>
    %80 = vector.shape_cast %79 : vector<1x8x8xbf16> to vector<8x8xbf16>
    %c0_46 = arith.constant 0 : index
    %c0_47 = arith.constant 0 : index
    %c88 = arith.constant 88 : index
    %81 = vector.load %arg2[%c0_46, %c0_47, %c88] : memref<1x8x96xbf16, #tpu.memory_space<vmem>>, vector<1x8x8xbf16>
    %82 = vector.shape_cast %81 : vector<1x8x8xbf16> to vector<8x8xbf16>
    %cst_48 = arith.constant dense<0.000000e+00> : vector<8x8xf32>
    %83 = tpu.matmul %78, %80, %cst_48 {dimension_numbers = #tpu.dot_dimension_numbers<[1], [1], [0], [0], [0, 0, 1, 0], [], []>} : vector<8x8xbf16>, vector<8x8xbf16>, vector<8x8xf32> -> vector<8x8xf32>
    %cst_49 = arith.constant dense<0xFF800000> : vector<8xf32>
    %84 = vector.multi_reduction <maximumf>, %83, %cst_49 [1] : vector<8x8xf32> to vector<8xf32>
    %85 = vector.shape_cast %84 : vector<8xf32> to vector<8x1xf32>
    %86 = vector.broadcast %85 : vector<8x1xf32> to vector<8x8xf32>
    %87 = arith.subf %83, %86 : vector<8x8xf32>
    %88 = math.exp %87 : vector<8x8xf32>
    %cst_50 = arith.constant dense<0.000000e+00> : vector<8xf32>
    %89 = vector.multi_reduction <add>, %88, %cst_50 [1] : vector<8x8xf32> to vector<8xf32>
    %90 = vector.shape_cast %89 : vector<8xf32> to vector<8x1xf32>
    %91 = tpu.reciprocal %90 {approx = true} : vector<8x1xf32> -> vector<8x1xf32>
    %92 = vector.broadcast %91 : vector<8x1xf32> to vector<8x8xf32>
    %93 = arith.mulf %88, %92 : vector<8x8xf32>
    %94 = arith.truncf %93 : vector<8x8xf32> to vector<8x8xbf16>
    %cst_51 = arith.constant dense<0.000000e+00> : vector<8x8xf32>
    %95 = tpu.matmul %94, %82, %cst_51 {dimension_numbers = #tpu.dot_dimension_numbers<[1], [0], [0], [1], [0, 0, 1, 1], [], []>} : vector<8x8xbf16>, vector<8x8xbf16>, vector<8x8xf32> -> vector<8x8xf32>
    %96 = arith.truncf %95 : vector<8x8xf32> to vector<8x8xbf16>
    %c0_52 = arith.constant 0 : index
    %c0_53 = arith.constant 0 : index
    %c24_54 = arith.constant 24 : index
    %97 = vector.load %arg3[%c0_52, %c0_53, %c24_54] : memref<1x8x32xbf16, #tpu.memory_space<vmem>>, vector<1x8x8xbf16>
    %98 = vector.shape_cast %97 : vector<1x8x8xbf16> to vector<8x8xbf16>
    %99 = vector.shape_cast %96 : vector<8x8xbf16> to vector<1x8x8xbf16>
    tpu.vector_store %arg3[%c0_52, %c0_53, %c24_54], %99 {strides = array<i32>} : memref<1x8x32xbf16, #tpu.memory_space<vmem>>, vector<1x8x8xbf16>,
    return
  }
  func.func @transform_0(%arg0: i32, %arg1: i32) -> (i32, i32, i32) {
    %c0_i32 = arith.constant 0 : i32
    %c0_i32_0 = arith.constant 0 : i32
    return %arg0, %c0_i32, %arg1 : i32, i32, i32
  }
  func.func @transform_1(%arg0: i32, %arg1: i32) -> (i32, i32, i32) {
    %c0_i32 = arith.constant 0 : i32
    %c0_i32_0 = arith.constant 0 : i32
    return %arg0, %c0_i32, %arg1 : i32, i32, i32
  }
}

module attributes {stable_mosaic.version = 11 : i64} {
  func.func @_linear_kernel(%arg0: i32, %arg1: i32, %arg2: i32, %arg3: memref<16x32xbf16, #tpu.memory_space<vmem>>, %arg4: memref<32x64xbf16, #tpu.memory_space<vmem>>, %arg5: memref<1x64xf32, #tpu.memory_space<vmem>>, %arg6: memref<16x64xbf16, #tpu.memory_space<vmem>>, %arg7: memref<16x64xf32, #tpu.memory_space<vmem>>) attributes {dimension_semantics = [#tpu.dimension_semantics<parallel>, #tpu.dimension_semantics<parallel>, #tpu.dimension_semantics<arbitrary>], iteration_bounds = array<i64: 1, 1, 1>, scalar_prefetch = 0 : i64, scratch_operands = 1 : i64, tpu.core_type = #tpu.core_type<tc>, window_params = [{transform_indices = @transform_0, window_bounds = array<i64: 16, 32>}, {transform_indices = @transform_1, window_bounds = array<i64: 32, 64>}, {transform_indices = @transform_2, window_bounds = array<i64: 1, 64>}, {transform_indices = @transform_3, window_bounds = array<i64: 16, 64>}]} {
    %c0_i32 = arith.constant 0 : i32
    %0 = arith.cmpi eq, %arg2, %c0_i32 : i32
    %1 = arith.extui %0 : i1 to i32
    %c0_i32_0 = arith.constant 0 : i32
    %2 = arith.cmpi ne, %1, %c0_i32_0 : i32
    scf.if %2 {
      %cst_10 = arith.constant 0.000000e+00 : f32
      %12 = vector.broadcast %cst_10 : f32 to vector<16x64xf32>
      %c0_11 = arith.constant 0 : index
      %c0_12 = arith.constant 0 : index
      %13 = vector.load %arg7[%c0_11, %c0_12] : memref<16x64xf32, #tpu.memory_space<vmem>>, vector<16x64xf32>
      tpu.vector_store %arg7[%c0_11, %c0_12], %12 {strides = array<i32>} : memref<16x64xf32, #tpu.memory_space<vmem>>, vector<16x64xf32>,
    } else {
    }
    %c0 = arith.constant 0 : index
    %c0_1 = arith.constant 0 : index
    %3 = vector.load %arg7[%c0, %c0_1] : memref<16x64xf32, #tpu.memory_space<vmem>>, vector<16x64xf32>
    %c0_2 = arith.constant 0 : index
    %c0_3 = arith.constant 0 : index
    %4 = vector.load %arg3[%c0_2, %c0_3] : memref<16x32xbf16, #tpu.memory_space<vmem>>, vector<16x32xbf16>
    %c0_4 = arith.constant 0 : index
    %c0_5 = arith.constant 0 : index
    %5 = vector.load %arg4[%c0_4, %c0_5] : memref<32x64xbf16, #tpu.memory_space<vmem>>, vector<32x64xbf16>
    %cst = arith.constant dense<0.000000e+00> : vector<16x64xf32>
    %6 = tpu.matmul %4, %5, %cst {dimension_numbers = #tpu.dot_dimension_numbers<[1], [0], [0], [1], [0, 0, 1, 1], [], []>} : vector<16x32xbf16>, vector<32x64xbf16>, vector<16x64xf32> -> vector<16x64xf32>
    %7 = arith.addf %3, %6 : vector<16x64xf32>
    %c0_6 = arith.constant 0 : index
    %c0_7 = arith.constant 0 : index
    %8 = vector.load %arg7[%c0_6, %c0_7] : memref<16x64xf32, #tpu.memory_space<vmem>>, vector<16x64xf32>
    tpu.vector_store %arg7[%c0_6, %c0_7], %7 {strides = array<i32>} : memref<16x64xf32, #tpu.memory_space<vmem>>, vector<16x64xf32>,
    %c0_i32_8 = arith.constant 0 : i32
    %9 = arith.cmpi eq, %arg2, %c0_i32_8 : i32
    %10 = arith.extui %9 : i1 to i32
    %c0_i32_9 = arith.constant 0 : i32
    %11 = arith.cmpi ne, %10, %c0_i32_9 : i32
    scf.if %11 {
      %c0_10 = arith.constant 0 : index
      %c0_11 = arith.constant 0 : index
      %12 = vector.load %arg7[%c0_10, %c0_11] : memref<16x64xf32, #tpu.memory_space<vmem>>, vector<16x64xf32>
      %c0_12 = arith.constant 0 : index
      %c0_13 = arith.constant 0 : index
      %13 = vector.load %arg5[%c0_12, %c0_13] : memref<1x64xf32, #tpu.memory_space<vmem>>, vector<1x64xf32>
      %14 = vector.broadcast %13 : vector<1x64xf32> to vector<16x64xf32>
      %15 = arith.addf %12, %14 : vector<16x64xf32>
      %cst_14 = arith.constant 0.000000e+00 : f32
      %16 = vector.broadcast %cst_14 : f32 to vector<16x64xf32>
      %17 = arith.maximumf %15, %16 : vector<16x64xf32>
      %18 = arith.truncf %17 : vector<16x64xf32> to vector<16x64xbf16>
      %c0_15 = arith.constant 0 : index
      %c0_16 = arith.constant 0 : index
      %19 = vector.load %arg6[%c0_15, %c0_16] : memref<16x64xbf16, #tpu.memory_space<vmem>>, vector<16x64xbf16>
      tpu.vector_store %arg6[%c0_15, %c0_16], %18 {strides = array<i32>} : memref<16x64xbf16, #tpu.memory_space<vmem>>, vector<16x64xbf16>,
    } else {
    }
    return
  }
  func.func @transform_0(%arg0: i32, %arg1: i32, %arg2: i32) -> (i32, i32) {
    %c0_i32 = arith.constant 0 : i32
    return %arg0, %arg2 : i32, i32
  }
  func.func @transform_1(%arg0: i32, %arg1: i32, %arg2: i32) -> (i32, i32) {
    %c0_i32 = arith.constant 0 : i32
    return %arg2, %arg1 : i32, i32
  }
  func.func @transform_2(%arg0: i32, %arg1: i32, %arg2: i32) -> (i32, i32) {
    %c0_i32 = arith.constant 0 : i32
    %c0_i32_0 = arith.constant 0 : i32
    return %c0_i32, %arg1 : i32, i32
  }
  func.func @transform_3(%arg0: i32, %arg1: i32, %arg2: i32) -> (i32, i32) {
    %c0_i32 = arith.constant 0 : i32
    return %arg0, %arg1 : i32, i32
  }
}

module attributes {stable_mosaic.version = 11 : i64} {
  func.func @_linear_addln_kernel(%arg0: i32, %arg1: i32, %arg2: memref<16x64xbf16, #tpu.memory_space<vmem>>, %arg3: memref<64x32xbf16, #tpu.memory_space<vmem>>, %arg4: memref<1x32xf32, #tpu.memory_space<vmem>>, %arg5: memref<16x32xbf16, #tpu.memory_space<vmem>>, %arg6: memref<1x32xf32, #tpu.memory_space<vmem>>, %arg7: memref<1x32xf32, #tpu.memory_space<vmem>>, %arg8: memref<16x32xbf16, #tpu.memory_space<vmem>>, %arg9: memref<16x32xf32, #tpu.memory_space<vmem>>) attributes {dimension_semantics = [#tpu.dimension_semantics<parallel>, #tpu.dimension_semantics<arbitrary>], iteration_bounds = array<i64: 1, 1>, scalar_prefetch = 0 : i64, scratch_operands = 1 : i64, tpu.core_type = #tpu.core_type<tc>, window_params = [{transform_indices = @transform_0, window_bounds = array<i64: 16, 64>}, {transform_indices = @transform_1, window_bounds = array<i64: 64, 32>}, {pipeline_mode = #tpu.pipeline_mode<synchronous>, transform_indices = @transform_2, window_bounds = array<i64: 1, 32>}, {transform_indices = @transform_3, window_bounds = array<i64: 16, 32>}, {pipeline_mode = #tpu.pipeline_mode<synchronous>, transform_indices = @transform_4, window_bounds = array<i64: 1, 32>}, {pipeline_mode = #tpu.pipeline_mode<synchronous>, transform_indices = @transform_5, window_bounds = array<i64: 1, 32>}, {transform_indices = @transform_6, window_bounds = array<i64: 16, 32>}]} {
    %c0_i32 = arith.constant 0 : i32
    %0 = arith.cmpi eq, %arg1, %c0_i32 : i32
    %1 = arith.extui %0 : i1 to i32
    %c0_i32_0 = arith.constant 0 : i32
    %2 = arith.cmpi ne, %1, %c0_i32_0 : i32
    scf.if %2 {
      %cst_10 = arith.constant 0.000000e+00 : f32
      %12 = vector.broadcast %cst_10 : f32 to vector<16x32xf32>
      %c0_11 = arith.constant 0 : index
      %c0_12 = arith.constant 0 : index
      %13 = vector.load %arg9[%c0_11, %c0_12] : memref<16x32xf32, #tpu.memory_space<vmem>>, vector<16x32xf32>
      tpu.vector_store %arg9[%c0_11, %c0_12], %12 {strides = array<i32>} : memref<16x32xf32, #tpu.memory_space<vmem>>, vector<16x32xf32>,
    } else {
    }
    %c0 = arith.constant 0 : index
    %c0_1 = arith.constant 0 : index
    %3 = vector.load %arg9[%c0, %c0_1] : memref<16x32xf32, #tpu.memory_space<vmem>>, vector<16x32xf32>
    %c0_2 = arith.constant 0 : index
    %c0_3 = arith.constant 0 : index
    %4 = vector.load %arg2[%c0_2, %c0_3] : memref<16x64xbf16, #tpu.memory_space<vmem>>, vector<16x64xbf16>
    %c0_4 = arith.constant 0 : index
    %c0_5 = arith.constant 0 : index
    %5 = vector.load %arg3[%c0_4, %c0_5] : memref<64x32xbf16, #tpu.memory_space<vmem>>, vector<64x32xbf16>
    %cst = arith.constant dense<0.000000e+00> : vector<16x32xf32>
    %6 = tpu.matmul %4, %5, %cst {dimension_numbers = #tpu.dot_dimension_numbers<[1], [0], [0], [1], [0, 0, 1, 1], [], []>} : vector<16x64xbf16>, vector<64x32xbf16>, vector<16x32xf32> -> vector<16x32xf32>
    %7 = arith.addf %3, %6 : vector<16x32xf32>
    %c0_6 = arith.constant 0 : index
    %c0_7 = arith.constant 0 : index
    %8 = vector.load %arg9[%c0_6, %c0_7] : memref<16x32xf32, #tpu.memory_space<vmem>>, vector<16x32xf32>
    tpu.vector_store %arg9[%c0_6, %c0_7], %7 {strides = array<i32>} : memref<16x32xf32, #tpu.memory_space<vmem>>, vector<16x32xf32>,
    %c0_i32_8 = arith.constant 0 : i32
    %9 = arith.cmpi eq, %arg1, %c0_i32_8 : i32
    %10 = arith.extui %9 : i1 to i32
    %c0_i32_9 = arith.constant 0 : i32
    %11 = arith.cmpi ne, %10, %c0_i32_9 : i32
    scf.if %11 {
      %c0_10 = arith.constant 0 : index
      %c0_11 = arith.constant 0 : index
      %12 = vector.load %arg9[%c0_10, %c0_11] : memref<16x32xf32, #tpu.memory_space<vmem>>, vector<16x32xf32>
      %c0_12 = arith.constant 0 : index
      %c0_13 = arith.constant 0 : index
      %13 = vector.load %arg4[%c0_12, %c0_13] : memref<1x32xf32, #tpu.memory_space<vmem>>, vector<1x32xf32>
      %14 = vector.broadcast %13 : vector<1x32xf32> to vector<16x32xf32>
      %15 = arith.addf %12, %14 : vector<16x32xf32>
      %c0_14 = arith.constant 0 : index
      %c0_15 = arith.constant 0 : index
      %16 = vector.load %arg5[%c0_14, %c0_15] : memref<16x32xbf16, #tpu.memory_space<vmem>>, vector<16x32xbf16>
      %17 = arith.extf %16 : vector<16x32xbf16> to vector<16x32xf32>
      %18 = arith.addf %15, %17 : vector<16x32xf32>
      %cst_16 = arith.constant dense<0.000000e+00> : vector<16xf32>
      %19 = vector.multi_reduction <add>, %18, %cst_16 [1] : vector<16x32xf32> to vector<16xf32>
      %20 = vector.shape_cast %19 : vector<16xf32> to vector<16x1xf32>
      %cst_17 = arith.constant 3.200000e+01 : f32
      %21 = vector.broadcast %cst_17 : f32 to vector<16x1xf32>
      %22 = arith.divf %20, %21 : vector<16x1xf32>
      %23 = vector.broadcast %22 : vector<16x1xf32> to vector<16x32xf32>
      %24 = arith.subf %18, %23 : vector<16x32xf32>
      %25 = arith.mulf %24, %24 : vector<16x32xf32>
      %cst_18 = arith.constant dense<0.000000e+00> : vector<16xf32>
      %26 = vector.multi_reduction <add>, %25, %cst_18 [1] : vector<16x32xf32> to vector<16xf32>
      %27 = vector.shape_cast %26 : vector<16xf32> to vector<16x1xf32>
      %cst_19 = arith.constant 3.200000e+01 : f32
      %28 = vector.broadcast %cst_19 : f32 to vector<16x1xf32>
      %29 = arith.divf %27, %28 : vector<16x1xf32>
      %30 = vector.broadcast %22 : vector<16x1xf32> to vector<16x32xf32>
      %31 = arith.subf %18, %30 : vector<16x32xf32>
      %cst_20 = arith.constant 1.000000e-01 : f32
      %32 = vector.broadcast %cst_20 : f32 to vector<16x1xf32>
      %33 = arith.addf %29, %32 : vector<16x1xf32>
      %34 = math.rsqrt %33 : vector<16x1xf32>
      %35 = vector.broadcast %34 : vector<16x1xf32> to vector<16x32xf32>
      %36 = arith.mulf %31, %35 : vector<16x32xf32>
      %c0_21 = arith.constant 0 : index
      %c0_22 = arith.constant 0 : index
      %37 = vector.load %arg6[%c0_21, %c0_22] : memref<1x32xf32, #tpu.memory_space<vmem>>, vector<1x32xf32>
      %38 = vector.broadcast %37 : vector<1x32xf32> to vector<16x32xf32>
      %39 = arith.mulf %36, %38 : vector<16x32xf32>
      %c0_23 = arith.constant 0 : index
      %c0_24 = arith.constant 0 : index
      %40 = vector.load %arg7[%c0_23, %c0_24] : memref<1x32xf32, #tpu.memory_space<vmem>>, vector<1x32xf32>
      %41 = vector.broadcast %40 : vector<1x32xf32> to vector<16x32xf32>
      %42 = arith.addf %39, %41 : vector<16x32xf32>
      %43 = arith.truncf %42 : vector<16x32xf32> to vector<16x32xbf16>
      %c0_25 = arith.constant 0 : index
      %c0_26 = arith.constant 0 : index
      %44 = vector.load %arg8[%c0_25, %c0_26] : memref<16x32xbf16, #tpu.memory_space<vmem>>, vector<16x32xbf16>
      tpu.vector_store %arg8[%c0_25, %c0_26], %43 {strides = array<i32>} : memref<16x32xbf16, #tpu.memory_space<vmem>>, vector<16x32xbf16>,
    } else {
    }
    return
  }
  func.func @transform_0(%arg0: i32, %arg1: i32) -> (i32, i32) {
    %c0_i32 = arith.constant 0 : i32
    return %arg0, %arg1 : i32, i32
  }
  func.func @transform_1(%arg0: i32, %arg1: i32) -> (i32, i32) {
    %c0_i32 = arith.constant 0 : i32
    %c0_i32_0 = arith.constant 0 : i32
    return %arg1, %c0_i32 : i32, i32
  }
  func.func @transform_2(%arg0: i32, %arg1: i32) -> (i32, i32) {
    %c0_i32 = arith.constant 0 : i32
    %c0_i32_0 = arith.constant 0 : i32
    %c0_i32_1 = arith.constant 0 : i32
    return %c0_i32, %c0_i32_0 : i32, i32
  }
  func.func @transform_3(%arg0: i32, %arg1: i32) -> (i32, i32) {
    %c0_i32 = arith.constant 0 : i32
    %c0_i32_0 = arith.constant 0 : i32
    return %arg0, %c0_i32 : i32, i32
  }
  func.func @transform_4(%arg0: i32, %arg1: i32) -> (i32, i32) {
    %c0_i32 = arith.constant 0 : i32
    %c0_i32_0 = arith.constant 0 : i32
    %c0_i32_1 = arith.constant 0 : i32
    return %c0_i32, %c0_i32_0 : i32, i32
  }
  func.func @transform_5(%arg0: i32, %arg1: i32) -> (i32, i32) {
    %c0_i32 = arith.constant 0 : i32
    %c0_i32_0 = arith.constant 0 : i32
    %c0_i32_1 = arith.constant 0 : i32
    return %c0_i32, %c0_i32_0 : i32, i32
  }
  func.func @transform_6(%arg0: i32, %arg1: i32) -> (i32, i32) {
    %c0_i32 = arith.constant 0 : i32
    %c0_i32_0 = arith.constant 0 : i32
    return %arg0, %c0_i32 : i32, i32
  }
}

module attributes {stable_mosaic.version = 11 : i64} {
  func.func @_linear_addln_kernel(%arg0: i32, %arg1: i32, %arg2: memref<16x32xbf16, #tpu.memory_space<vmem>>, %arg3: memref<32x32xbf16, #tpu.memory_space<vmem>>, %arg4: memref<1x32xf32, #tpu.memory_space<vmem>>, %arg5: memref<16x32xbf16, #tpu.memory_space<vmem>>, %arg6: memref<1x32xf32, #tpu.memory_space<vmem>>, %arg7: memref<1x32xf32, #tpu.memory_space<vmem>>, %arg8: memref<16x32xbf16, #tpu.memory_space<vmem>>, %arg9: memref<16x32xf32, #tpu.memory_space<vmem>>) attributes {dimension_semantics = [#tpu.dimension_semantics<parallel>, #tpu.dimension_semantics<arbitrary>], iteration_bounds = array<i64: 1, 1>, scalar_prefetch = 0 : i64, scratch_operands = 1 : i64, tpu.core_type = #tpu.core_type<tc>, window_params = [{transform_indices = @transform_0, window_bounds = array<i64: 16, 32>}, {transform_indices = @transform_1, window_bounds = array<i64: 32, 32>}, {pipeline_mode = #tpu.pipeline_mode<synchronous>, transform_indices = @transform_2, window_bounds = array<i64: 1, 32>}, {transform_indices = @transform_3, window_bounds = array<i64: 16, 32>}, {pipeline_mode = #tpu.pipeline_mode<synchronous>, transform_indices = @transform_4, window_bounds = array<i64: 1, 32>}, {pipeline_mode = #tpu.pipeline_mode<synchronous>, transform_indices = @transform_5, window_bounds = array<i64: 1, 32>}, {transform_indices = @transform_6, window_bounds = array<i64: 16, 32>}]} {
    %c0_i32 = arith.constant 0 : i32
    %0 = arith.cmpi eq, %arg1, %c0_i32 : i32
    %1 = arith.extui %0 : i1 to i32
    %c0_i32_0 = arith.constant 0 : i32
    %2 = arith.cmpi ne, %1, %c0_i32_0 : i32
    scf.if %2 {
      %cst_10 = arith.constant 0.000000e+00 : f32
      %12 = vector.broadcast %cst_10 : f32 to vector<16x32xf32>
      %c0_11 = arith.constant 0 : index
      %c0_12 = arith.constant 0 : index
      %13 = vector.load %arg9[%c0_11, %c0_12] : memref<16x32xf32, #tpu.memory_space<vmem>>, vector<16x32xf32>
      tpu.vector_store %arg9[%c0_11, %c0_12], %12 {strides = array<i32>} : memref<16x32xf32, #tpu.memory_space<vmem>>, vector<16x32xf32>,
    } else {
    }
    %c0 = arith.constant 0 : index
    %c0_1 = arith.constant 0 : index
    %3 = vector.load %arg9[%c0, %c0_1] : memref<16x32xf32, #tpu.memory_space<vmem>>, vector<16x32xf32>
    %c0_2 = arith.constant 0 : index
    %c0_3 = arith.constant 0 : index
    %4 = vector.load %arg2[%c0_2, %c0_3] : memref<16x32xbf16, #tpu.memory_space<vmem>>, vector<16x32xbf16>
    %c0_4 = arith.constant 0 : index
    %c0_5 = arith.constant 0 : index
    %5 = vector.load %arg3[%c0_4, %c0_5] : memref<32x32xbf16, #tpu.memory_space<vmem>>, vector<32x32xbf16>
    %cst = arith.constant dense<0.000000e+00> : vector<16x32xf32>
    %6 = tpu.matmul %4, %5, %cst {dimension_numbers = #tpu.dot_dimension_numbers<[1], [0], [0], [1], [0, 0, 1, 1], [], []>} : vector<16x32xbf16>, vector<32x32xbf16>, vector<16x32xf32> -> vector<16x32xf32>
    %7 = arith.addf %3, %6 : vector<16x32xf32>
    %c0_6 = arith.constant 0 : index
    %c0_7 = arith.constant 0 : index
    %8 = vector.load %arg9[%c0_6, %c0_7] : memref<16x32xf32, #tpu.memory_space<vmem>>, vector<16x32xf32>
    tpu.vector_store %arg9[%c0_6, %c0_7], %7 {strides = array<i32>} : memref<16x32xf32, #tpu.memory_space<vmem>>, vector<16x32xf32>,
    %c0_i32_8 = arith.constant 0 : i32
    %9 = arith.cmpi eq, %arg1, %c0_i32_8 : i32
    %10 = arith.extui %9 : i1 to i32
    %c0_i32_9 = arith.constant 0 : i32
    %11 = arith.cmpi ne, %10, %c0_i32_9 : i32
    scf.if %11 {
      %c0_10 = arith.constant 0 : index
      %c0_11 = arith.constant 0 : index
      %12 = vector.load %arg9[%c0_10, %c0_11] : memref<16x32xf32, #tpu.memory_space<vmem>>, vector<16x32xf32>
      %c0_12 = arith.constant 0 : index
      %c0_13 = arith.constant 0 : index
      %13 = vector.load %arg4[%c0_12, %c0_13] : memref<1x32xf32, #tpu.memory_space<vmem>>, vector<1x32xf32>
      %14 = vector.broadcast %13 : vector<1x32xf32> to vector<16x32xf32>
      %15 = arith.addf %12, %14 : vector<16x32xf32>
      %c0_14 = arith.constant 0 : index
      %c0_15 = arith.constant 0 : index
      %16 = vector.load %arg5[%c0_14, %c0_15] : memref<16x32xbf16, #tpu.memory_space<vmem>>, vector<16x32xbf16>
      %17 = arith.extf %16 : vector<16x32xbf16> to vector<16x32xf32>
      %18 = arith.addf %15, %17 : vector<16x32xf32>
      %cst_16 = arith.constant dense<0.000000e+00> : vector<16xf32>
      %19 = vector.multi_reduction <add>, %18, %cst_16 [1] : vector<16x32xf32> to vector<16xf32>
      %20 = vector.shape_cast %19 : vector<16xf32> to vector<16x1xf32>
      %cst_17 = arith.constant 3.200000e+01 : f32
      %21 = vector.broadcast %cst_17 : f32 to vector<16x1xf32>
      %22 = arith.divf %20, %21 : vector<16x1xf32>
      %23 = vector.broadcast %22 : vector<16x1xf32> to vector<16x32xf32>
      %24 = arith.subf %18, %23 : vector<16x32xf32>
      %25 = arith.mulf %24, %24 : vector<16x32xf32>
      %cst_18 = arith.constant dense<0.000000e+00> : vector<16xf32>
      %26 = vector.multi_reduction <add>, %25, %cst_18 [1] : vector<16x32xf32> to vector<16xf32>
      %27 = vector.shape_cast %26 : vector<16xf32> to vector<16x1xf32>
      %cst_19 = arith.constant 3.200000e+01 : f32
      %28 = vector.broadcast %cst_19 : f32 to vector<16x1xf32>
      %29 = arith.divf %27, %28 : vector<16x1xf32>
      %30 = vector.broadcast %22 : vector<16x1xf32> to vector<16x32xf32>
      %31 = arith.subf %18, %30 : vector<16x32xf32>
      %cst_20 = arith.constant 1.000000e-01 : f32
      %32 = vector.broadcast %cst_20 : f32 to vector<16x1xf32>
      %33 = arith.addf %29, %32 : vector<16x1xf32>
      %34 = math.rsqrt %33 : vector<16x1xf32>
      %35 = vector.broadcast %34 : vector<16x1xf32> to vector<16x32xf32>
      %36 = arith.mulf %31, %35 : vector<16x32xf32>
      %c0_21 = arith.constant 0 : index
      %c0_22 = arith.constant 0 : index
      %37 = vector.load %arg6[%c0_21, %c0_22] : memref<1x32xf32, #tpu.memory_space<vmem>>, vector<1x32xf32>
      %38 = vector.broadcast %37 : vector<1x32xf32> to vector<16x32xf32>
      %39 = arith.mulf %36, %38 : vector<16x32xf32>
      %c0_23 = arith.constant 0 : index
      %c0_24 = arith.constant 0 : index
      %40 = vector.load %arg7[%c0_23, %c0_24] : memref<1x32xf32, #tpu.memory_space<vmem>>, vector<1x32xf32>
      %41 = vector.broadcast %40 : vector<1x32xf32> to vector<16x32xf32>
      %42 = arith.addf %39, %41 : vector<16x32xf32>
      %43 = arith.truncf %42 : vector<16x32xf32> to vector<16x32xbf16>
      %c0_25 = arith.constant 0 : index
      %c0_26 = arith.constant 0 : index
      %44 = vector.load %arg8[%c0_25, %c0_26] : memref<16x32xbf16, #tpu.memory_space<vmem>>, vector<16x32xbf16>
      tpu.vector_store %arg8[%c0_25, %c0_26], %43 {strides = array<i32>} : memref<16x32xbf16, #tpu.memory_space<vmem>>, vector<16x32xbf16>,
    } else {
    }
    return
  }
  func.func @transform_0(%arg0: i32, %arg1: i32) -> (i32, i32) {
    %c0_i32 = arith.constant 0 : i32
    return %arg0, %arg1 : i32, i32
  }
  func.func @transform_1(%arg0: i32, %arg1: i32) -> (i32, i32) {
    %c0_i32 = arith.constant 0 : i32
    %c0_i32_0 = arith.constant 0 : i32
    return %arg1, %c0_i32 : i32, i32
  }
  func.func @transform_2(%arg0: i32, %arg1: i32) -> (i32, i32) {
    %c0_i32 = arith.constant 0 : i32
    %c0_i32_0 = arith.constant 0 : i32
    %c0_i32_1 = arith.constant 0 : i32
    return %c0_i32, %c0_i32_0 : i32, i32
  }
  func.func @transform_3(%arg0: i32, %arg1: i32) -> (i32, i32) {
    %c0_i32 = arith.constant 0 : i32
    %c0_i32_0 = arith.constant 0 : i32
    return %arg0, %c0_i32 : i32, i32
  }
  func.func @transform_4(%arg0: i32, %arg1: i32) -> (i32, i32) {
    %c0_i32 = arith.constant 0 : i32
    %c0_i32_0 = arith.constant 0 : i32
    %c0_i32_1 = arith.constant 0 : i32
    return %c0_i32, %c0_i32_0 : i32, i32
  }
  func.func @transform_5(%arg0: i32, %arg1: i32) -> (i32, i32) {
    %c0_i32 = arith.constant 0 : i32
    %c0_i32_0 = arith.constant 0 : i32
    %c0_i32_1 = arith.constant 0 : i32
    return %c0_i32, %c0_i32_0 : i32, i32
  }
  func.func @transform_6(%arg0: i32, %arg1: i32) -> (i32, i32) {
    %c0_i32 = arith.constant 0 : i32
    %c0_i32_0 = arith.constant 0 : i32
    return %arg0, %c0_i32 : i32, i32
  }
}

module attributes {stable_mosaic.version = 11 : i64} {
  func.func @_linear_kernel(%arg0: i32, %arg1: i32, %arg2: i32, %arg3: memref<16x32xbf16, #tpu.memory_space<vmem>>, %arg4: memref<32x32xbf16, #tpu.memory_space<vmem>>, %arg5: memref<1x32xf32, #tpu.memory_space<vmem>>, %arg6: memref<16x32xbf16, #tpu.memory_space<vmem>>, %arg7: memref<16x32xf32, #tpu.memory_space<vmem>>) attributes {dimension_semantics = [#tpu.dimension_semantics<parallel>, #tpu.dimension_semantics<parallel>, #tpu.dimension_semantics<arbitrary>], iteration_bounds = array<i64: 1, 1, 1>, scalar_prefetch = 0 : i64, scratch_operands = 1 : i64, tpu.core_type = #tpu.core_type<tc>, window_params = [{transform_indices = @transform_0, window_bounds = array<i64: 16, 32>}, {transform_indices = @transform_1, window_bounds = array<i64: 32, 32>}, {transform_indices = @transform_2, window_bounds = array<i64: 1, 32>}, {transform_indices = @transform_3, window_bounds = array<i64: 16, 32>}]} {
    %c0_i32 = arith.constant 0 : i32
    %0 = arith.cmpi eq, %arg2, %c0_i32 : i32
    %1 = arith.extui %0 : i1 to i32
    %c0_i32_0 = arith.constant 0 : i32
    %2 = arith.cmpi ne, %1, %c0_i32_0 : i32
    scf.if %2 {
      %cst_10 = arith.constant 0.000000e+00 : f32
      %12 = vector.broadcast %cst_10 : f32 to vector<16x32xf32>
      %c0_11 = arith.constant 0 : index
      %c0_12 = arith.constant 0 : index
      %13 = vector.load %arg7[%c0_11, %c0_12] : memref<16x32xf32, #tpu.memory_space<vmem>>, vector<16x32xf32>
      tpu.vector_store %arg7[%c0_11, %c0_12], %12 {strides = array<i32>} : memref<16x32xf32, #tpu.memory_space<vmem>>, vector<16x32xf32>,
    } else {
    }
    %c0 = arith.constant 0 : index
    %c0_1 = arith.constant 0 : index
    %3 = vector.load %arg7[%c0, %c0_1] : memref<16x32xf32, #tpu.memory_space<vmem>>, vector<16x32xf32>
    %c0_2 = arith.constant 0 : index
    %c0_3 = arith.constant 0 : index
    %4 = vector.load %arg3[%c0_2, %c0_3] : memref<16x32xbf16, #tpu.memory_space<vmem>>, vector<16x32xbf16>
    %c0_4 = arith.constant 0 : index
    %c0_5 = arith.constant 0 : index
    %5 = vector.load %arg4[%c0_4, %c0_5] : memref<32x32xbf16, #tpu.memory_space<vmem>>, vector<32x32xbf16>
    %cst = arith.constant dense<0.000000e+00> : vector<16x32xf32>
    %6 = tpu.matmul %4, %5, %cst {dimension_numbers = #tpu.dot_dimension_numbers<[1], [0], [0], [1], [0, 0, 1, 1], [], []>} : vector<16x32xbf16>, vector<32x32xbf16>, vector<16x32xf32> -> vector<16x32xf32>
    %7 = arith.addf %3, %6 : vector<16x32xf32>
    %c0_6 = arith.constant 0 : index
    %c0_7 = arith.constant 0 : index
    %8 = vector.load %arg7[%c0_6, %c0_7] : memref<16x32xf32, #tpu.memory_space<vmem>>, vector<16x32xf32>
    tpu.vector_store %arg7[%c0_6, %c0_7], %7 {strides = array<i32>} : memref<16x32xf32, #tpu.memory_space<vmem>>, vector<16x32xf32>,
    %c0_i32_8 = arith.constant 0 : i32
    %9 = arith.cmpi eq, %arg2, %c0_i32_8 : i32
    %10 = arith.extui %9 : i1 to i32
    %c0_i32_9 = arith.constant 0 : i32
    %11 = arith.cmpi ne, %10, %c0_i32_9 : i32
    scf.if %11 {
      %c0_10 = arith.constant 0 : index
      %c0_11 = arith.constant 0 : index
      %12 = vector.load %arg7[%c0_10, %c0_11] : memref<16x32xf32, #tpu.memory_space<vmem>>, vector<16x32xf32>
      %c0_12 = arith.constant 0 : index
      %c0_13 = arith.constant 0 : index
      %13 = vector.load %arg5[%c0_12, %c0_13] : memref<1x32xf32, #tpu.memory_space<vmem>>, vector<1x32xf32>
      %14 = vector.broadcast %13 : vector<1x32xf32> to vector<16x32xf32>
      %15 = arith.addf %12, %14 : vector<16x32xf32>
      %16 = math.tanh %15 : vector<16x32xf32>
      %17 = arith.truncf %16 : vector<16x32xf32> to vector<16x32xbf16>
      %c0_14 = arith.constant 0 : index
      %c0_15 = arith.constant 0 : index
      %18 = vector.load %arg6[%c0_14, %c0_15] : memref<16x32xbf16, #tpu.memory_space<vmem>>, vector<16x32xbf16>
      tpu.vector_store %arg6[%c0_14, %c0_15], %17 {strides = array<i32>} : memref<16x32xbf16, #tpu.memory_space<vmem>>, vector<16x32xbf16>,
    } else {
    }
    return
  }
  func.func @transform_0(%arg0: i32, %arg1: i32, %arg2: i32) -> (i32, i32) {
    %c0_i32 = arith.constant 0 : i32
    return %arg0, %arg2 : i32, i32
  }
  func.func @transform_1(%arg0: i32, %arg1: i32, %arg2: i32) -> (i32, i32) {
    %c0_i32 = arith.constant 0 : i32
    return %arg2, %arg1 : i32, i32
  }
  func.func @transform_2(%arg0: i32, %arg1: i32, %arg2: i32) -> (i32, i32) {
    %c0_i32 = arith.constant 0 : i32
    %c0_i32_0 = arith.constant 0 : i32
    return %c0_i32, %arg1 : i32, i32
  }
  func.func @transform_3(%arg0: i32, %arg1: i32, %arg2: i32) -> (i32, i32) {
    %c0_i32 = arith.constant 0 : i32
    return %arg0, %arg1 : i32, i32
  }
}

module attributes {stable_mosaic.version = 11 : i64} {
  func.func @_linear_kernel(%arg0: i32, %arg1: i32, %arg2: i32, %arg3: memref<16x32xbf16, #tpu.memory_space<vmem>>, %arg4: memref<32x48xbf16, #tpu.memory_space<vmem>>, %arg5: memref<1x48xf32, #tpu.memory_space<vmem>>, %arg6: memref<16x48xf32, #tpu.memory_space<vmem>>, %arg7: memref<16x48xf32, #tpu.memory_space<vmem>>) attributes {dimension_semantics = [#tpu.dimension_semantics<parallel>, #tpu.dimension_semantics<parallel>, #tpu.dimension_semantics<arbitrary>], iteration_bounds = array<i64: 1, 1, 1>, scalar_prefetch = 0 : i64, scratch_operands = 1 : i64, tpu.core_type = #tpu.core_type<tc>, window_params = [{transform_indices = @transform_0, window_bounds = array<i64: 16, 32>}, {transform_indices = @transform_1, window_bounds = array<i64: 32, 48>}, {transform_indices = @transform_2, window_bounds = array<i64: 1, 48>}, {transform_indices = @transform_3, window_bounds = array<i64: 16, 48>}]} {
    %c0_i32 = arith.constant 0 : i32
    %0 = arith.cmpi eq, %arg2, %c0_i32 : i32
    %1 = arith.extui %0 : i1 to i32
    %c0_i32_0 = arith.constant 0 : i32
    %2 = arith.cmpi ne, %1, %c0_i32_0 : i32
    scf.if %2 {
      %cst_10 = arith.constant 0.000000e+00 : f32
      %12 = vector.broadcast %cst_10 : f32 to vector<16x48xf32>
      %c0_11 = arith.constant 0 : index
      %c0_12 = arith.constant 0 : index
      %13 = vector.load %arg7[%c0_11, %c0_12] : memref<16x48xf32, #tpu.memory_space<vmem>>, vector<16x48xf32>
      tpu.vector_store %arg7[%c0_11, %c0_12], %12 {strides = array<i32>} : memref<16x48xf32, #tpu.memory_space<vmem>>, vector<16x48xf32>,
    } else {
    }
    %c0 = arith.constant 0 : index
    %c0_1 = arith.constant 0 : index
    %3 = vector.load %arg7[%c0, %c0_1] : memref<16x48xf32, #tpu.memory_space<vmem>>, vector<16x48xf32>
    %c0_2 = arith.constant 0 : index
    %c0_3 = arith.constant 0 : index
    %4 = vector.load %arg3[%c0_2, %c0_3] : memref<16x32xbf16, #tpu.memory_space<vmem>>, vector<16x32xbf16>
    %c0_4 = arith.constant 0 : index
    %c0_5 = arith.constant 0 : index
    %5 = vector.load %arg4[%c0_4, %c0_5] : memref<32x48xbf16, #tpu.memory_space<vmem>>, vector<32x48xbf16>
    %cst = arith.constant dense<0.000000e+00> : vector<16x48xf32>
    %6 = tpu.matmul %4, %5, %cst {dimension_numbers = #tpu.dot_dimension_numbers<[1], [0], [0], [1], [0, 0, 1, 1], [], []>} : vector<16x32xbf16>, vector<32x48xbf16>, vector<16x48xf32> -> vector<16x48xf32>
    %7 = arith.addf %3, %6 : vector<16x48xf32>
    %c0_6 = arith.constant 0 : index
    %c0_7 = arith.constant 0 : index
    %8 = vector.load %arg7[%c0_6, %c0_7] : memref<16x48xf32, #tpu.memory_space<vmem>>, vector<16x48xf32>
    tpu.vector_store %arg7[%c0_6, %c0_7], %7 {strides = array<i32>} : memref<16x48xf32, #tpu.memory_space<vmem>>, vector<16x48xf32>,
    %c0_i32_8 = arith.constant 0 : i32
    %9 = arith.cmpi eq, %arg2, %c0_i32_8 : i32
    %10 = arith.extui %9 : i1 to i32
    %c0_i32_9 = arith.constant 0 : i32
    %11 = arith.cmpi ne, %10, %c0_i32_9 : i32
    scf.if %11 {
      %c0_10 = arith.constant 0 : index
      %c0_11 = arith.constant 0 : index
      %12 = vector.load %arg7[%c0_10, %c0_11] : memref<16x48xf32, #tpu.memory_space<vmem>>, vector<16x48xf32>
      %c0_12 = arith.constant 0 : index
      %c0_13 = arith.constant 0 : index
      %13 = vector.load %arg5[%c0_12, %c0_13] : memref<1x48xf32, #tpu.memory_space<vmem>>, vector<1x48xf32>
      %14 = vector.broadcast %13 : vector<1x48xf32> to vector<16x48xf32>
      %15 = arith.addf %12, %14 : vector<16x48xf32>
      %c0_14 = arith.constant 0 : index
      %c0_15 = arith.constant 0 : index
      %16 = vector.load %arg6[%c0_14, %c0_15] : memref<16x48xf32, #tpu.memory_space<vmem>>, vector<16x48xf32>
      tpu.vector_store %arg6[%c0_14, %c0_15], %15 {strides = array<i32>} : memref<16x48xf32, #tpu.memory_space<vmem>>, vector<16x48xf32>,
    } else {
    }
    return
  }
  func.func @transform_0(%arg0: i32, %arg1: i32, %arg2: i32) -> (i32, i32) {
    %c0_i32 = arith.constant 0 : i32
    return %arg0, %arg2 : i32, i32
  }
  func.func @transform_1(%arg0: i32, %arg1: i32, %arg2: i32) -> (i32, i32) {
    %c0_i32 = arith.constant 0 : i32
    return %arg2, %arg1 : i32, i32
  }
  func.func @transform_2(%arg0: i32, %arg1: i32, %arg2: i32) -> (i32, i32) {
    %c0_i32 = arith.constant 0 : i32
    %c0_i32_0 = arith.constant 0 : i32
    return %c0_i32, %arg1 : i32, i32
  }
  func.func @transform_3(%arg0: i32, %arg1: i32, %arg2: i32) -> (i32, i32) {
    %c0_i32 = arith.constant 0 : i32
    return %arg0, %arg1 : i32, i32
  }
}

</mosaic_0001>

<llo_original>
// kernel: bert_forward.14
$region0: #{bert_forward.14}
  #allocation0 [shape = 'u32[]', space=smem, size = 0x4, offset = 0x4, fixed_abs, tag = 'smem constant byte address 0x4 - core index']
  #allocation1 [shape = 'u32[72,128]{1,0:T(1,128)}', space=vmem, size = 0x9000, scoped, tag = 'internal scratch']
  #allocation2 [shape = 'f32[16,32]{1,0:T(8,128)}', space=vmem, size = 0x2000, scoped, tag = 'scratch operand']
  %s0 = inlined_call_operand.vmem [shape: bf16[16,32], index: 0, kind: input, shape index: {}]
  %s1 = inlined_call_operand.hbm [shape: bf16[32,32], index: 1, kind: input, shape index: {}]
  %s2 = inlined_call_operand.vmem [shape: f32[1,32], index: 2, kind: input, shape index: {}]
  %s3 = inlined_call_operand.vmem [shape: bf16[16,32], index: 3, kind: input, shape index: {}]
  %s4 = inlined_call_operand.vmem [shape: f32[1,32], index: 4, kind: input, shape index: {}]
  %s5 = inlined_call_operand.vmem [shape: f32[1,32], index: 5, kind: input, shape index: {}]
  %s6 = inlined_call_operand.vmem [shape: bf16[16,32], index: 6, kind: output, shape index: {}]
  %s7 = sld [smem:[#allocation0]]
  $region46: #{bert_forward.14} parent=0
    _
  %s9 = ssub.s32 1, %s7
  %s10 = scalar_select 0, %s9, %s7
  $region1: #{bert_forward.14} parent=0
    #allocation3 [shape = 'u8[8192]{0}', space=vmem, size = 0x2000, scoped, tag = 'input window, operand 1, single buffered']
    #allocation4 [shape = 's32[1]{0}', space=sflag, size = 0x4, scoped, tag = 'scoped memory for bert_forward.14']
    %11 = vsyncpa [#allocation4], 0
    // Predicated region
    $region2: #{bert_forward.14} parent=1 // pred_check
      _
    $region3: #{bert_forward.14} parent=1 // pred_check_branch
      %13 = sbr.rel (0) target = $region5
    $region4: #{bert_forward.14} parent=1 // pred_region
      _
    $region5: #{bert_forward.14} parent=1 // pred_fallthru
      _
    // Predicated region
    $region6: #{bert_forward.14} parent=1 // pred_check
      _
    $region7: #{bert_forward.14} parent=1 // pred_check_branch
      %15 = sbr.rel (0) target = $region9
    $region8: #{bert_forward.14} parent=1 // pred_region
      %17 = vsyncadd [#allocation4], 0
      %s18 = sshll.u32 %s1, 4
      %s19 = int_to_ptr.hbm [resolvable:$true] %s18
      %s20 = sshll.u32 [#allocation3], 4
      %s21 = int_to_ptr.vmem [resolvable:$true] %s20
      %26 = dma.hbm_to_vmem [thread:$0]  %s19, 256, %s21, [#allocation4], 64, 64, 4
    $region9: #{bert_forward.14} parent=1 // pred_fallthru
      _
    // Predicated region
    $region10: #{bert_forward.14} parent=1 // pred_check
      _
    $region11: #{bert_forward.14} parent=1 // pred_check_branch
      %28 = sbr.rel (0) target = $region13
    $region12: #{bert_forward.14} parent=1 // pred_region
      _
    $region13: #{bert_forward.14} parent=1 // pred_fallthru
      _
    // Predicated region
    $region14: #{bert_forward.14} parent=1 // pred_check
      _
    $region15: #{bert_forward.14} parent=1 // pred_check_branch
      %30 = sbr.rel (0) target = $region17
    $region16: #{bert_forward.14} parent=1 // pred_region
      _
    $region17: #{bert_forward.14} parent=1 // pred_fallthru
      _
    // Predicated region
    $region18: #{bert_forward.14} parent=1 // pred_check
      _
    $region19: #{bert_forward.14} parent=1 // pred_check_branch
      %32 = sbr.rel (0) target = $region21
    $region20: #{bert_forward.14} parent=1 // pred_region
      _
    $region21: #{bert_forward.14} parent=1 // pred_fallthru
      _
    // Predicated region
    $region22: #{bert_forward.14} parent=1 // pred_check
      _
    $region23: #{bert_forward.14} parent=1 // pred_check_branch
      %34 = sbr.rel (0) target = $region25
    $region24: #{bert_forward.14} parent=1 // pred_region
      _
    $region25: #{bert_forward.14} parent=1 // pred_fallthru
      _
    // Predicated region
    $region26: #{bert_forward.14} parent=1 // pred_check
      _
    $region27: #{bert_forward.14} parent=1 // pred_check_branch
      %36 = sbr.rel (0) target = $region29
    $region28: #{bert_forward.14} parent=1 // pred_region
      %38 = dma.done [#allocation4], 256
    $region29: #{bert_forward.14} parent=1 // pred_fallthru
      _
    %p40 = scmp.eq.s32.totalorder 0, 0
    // Predicated region
    $region30: #{bert_forward.14} parent=1 // pred_check
      %p41 = pneg %p40
    $region31: #{bert_forward.14} parent=1 // pred_check_branch
      %43 = sbr.rel (%p41) target = $region33
    $region32: #{bert_forward.14} parent=1 // pred_region
      %vm44 = vcmask 261120
      %45 = vst.msk [vmem:[#allocation2] sm:$0xff] %vm44, 0.0
      %46 = vst.msk [vmem:[#allocation2 + $0x8] sm:$0xff] %vm44, 0.0
    $region33: #{bert_forward.14} parent=1 // pred_fallthru
      _
    %v47 = vld [vmem:[#allocation2] sm:$0xff]
    %v48 = vld [vmem:[#allocation2 + $0x8] sm:$0xff]
    %v49 = vld [vmem:[%s0] sm:$0xf]
    %v50 = vld [vmem:[%s0 + $0x4] sm:$0xf]
    %v51 = vld [vmem:[#allocation3] sm:$0xf]
    %v52 = vld [vmem:[#allocation3 + $0x4] sm:$0xf]
    %v53 = vld [vmem:[#allocation3 + $0x8] sm:$0xf]
    %v54 = vld [vmem:[#allocation3 + $0xc] sm:$0xf]
    %v57 = vunpack.c.l.b16 %v49
    %v58 = vunpack.c.l.b16 %v50
    %v59 = vpack.c.b16 %v58, %v57
    %v64 = vunpack.c.l.b16 %v51
    %v65 = vunpack.c.l.b16 %v52
    %v66 = vunpack.c.l.b16 %v53
    %v67 = vunpack.c.l.b16 %v54
    %v68 = vpack.c.b16 %v65, %v64
    %v69 = vpack.c.b16 %v67, %v66
    %vm72 = vcmask 261120
    %v74 = vsel %vm72, %v59, 0
    %76 = vmatpush.bf16.msra.mxu0 0
    %77 = vmatpush.bf16.msra.mxu0 0
    %78 = vmatpush.bf16.msra.mxu0 0
    %79 = vmatpush.bf16.msra.mxu0 0
    %80 = vmatpush.bf16.msra.mxu0 0
    %81 = vmatpush.bf16.msra.mxu0 0
    %82 = vmatpush.bf16.msra.mxu0 %v69
    %83 = vmatpush.bf16.msra.mxu0 %v68
    %84 = vmatmul.bf16.gmra.mxu0 %v74
    %v85 = vpop.f32.mrf.mxu0
    %v86 = vadd.f32 0.0, %v85
    %v87 = vpop.f32.mrf.mxu0
    %v88 = vadd.f32 0.0, %v87
    %89 = vdwg.mxu0
    %v90 = vadd.f32 %v47, %v86
    %v91 = vadd.f32 %v48, %v88
    %92 = vst.msk [vmem:[#allocation2] sm:$0xff] %vm72, %v90
    %93 = vst.msk [vmem:[#allocation2 + $0x8] sm:$0xff] %vm72, %v91
    // Predicated region
    $region34: #{bert_forward.14} parent=1 // pred_check
      %p94 = pneg %p40
    $region35: #{bert_forward.14} parent=1 // pred_check_branch
      %96 = sbr.rel (%p94) target = $region37
    $region36: #{bert_forward.14} parent=1 // pred_region
      %v97 = vld [vmem:[#allocation2] sm:$0xff]
      %v98 = vld [vmem:[#allocation2 + $0x8] sm:$0xff]
      %v99 = vld [vmem:[%s2] sm:$0x1]
      %v101 = vperm.slane %v99, 0
      %v103 = vadd.f32 %v97, %v101
      %v104 = vadd.f32 %v98, %v101
      %v105 = vld [vmem:[%s3] sm:$0xf]
      %v106 = vld [vmem:[%s3 + $0x4] sm:$0xf]
      %v107 = vunpack.c.l.bf16 %v105
      %v108 = vunpack.c.l.bf16 %v106
      %v109 = vadd.f32 %v103, %v107
      %v110 = vadd.f32 %v104, %v108
      %v111 = vsel %vm72, %v109, 0.0
      %112 = vadd.xlane.f32.xlu0 %v111
      %v113 = vpop.xlane.xlu0 %112
      %v114 = vsel %vm72, %v110, 0.0
      %115 = vadd.xlane.f32.xlu0 %v114
      %v116 = vpop.xlane.xlu0 %115
      %v117 = vrcp.pop 32.0
      %v118 = vmul.f32 32.0, %v117
      %v119 = vsub.f32 1.0, %v118
      %v120 = vmul.f32 %v117, %v119
      %v121 = vadd.f32 %v117, %v120
      %vm122 = vweird.f32 %v117
      %v123 = vsel %vm122, %v117, %v121
      %v124 = vmul.f32 %v113, %v123
      %v125 = vmul.f32 %v116, %v123
      %v126 = vsub.f32 %v109, %v124
      %v127 = vsub.f32 %v110, %v125
      %v128 = vmul.f32 %v126, %v126
      %v129 = vmul.f32 %v127, %v127
      %v130 = vsel %vm72, %v128, 0.0
      %131 = vadd.xlane.f32.xlu0 %v130
      %v132 = vpop.xlane.xlu0 %131
      %v133 = vsel %vm72, %v129, 0.0
      %134 = vadd.xlane.f32.xlu0 %v133
      %v135 = vpop.xlane.xlu0 %134
      %v136 = vmul.f32 %v132, %v123
      %v137 = vmul.f32 %v135, %v123
      %v138 = vadd.f32 %v136, 0.1
      %v139 = vadd.f32 %v137, 0.1
      %v140 = vrsqrt.pop %v138
      %v141 = vmul.f32 %v140, %v138
      %v142 = vmul.f32 %v141, %v140
      %v143 = vmul.f32 0.5, %v142
      %v144 = vsub.f32 1.5, %v143
      %v145 = vmul.f32 %v140, %v144
      %vm146 = vweird.f32 %v138
      %vm147 = vweird.f32 %v140
      %vm148 = vmor %vm146, %vm147
      %v149 = vsel %vm148, %v140, %v145
      %v150 = vrsqrt.pop %v139
      %v151 = vmul.f32 %v150, %v139
      %v152 = vmul.f32 %v151, %v150
      %v153 = vmul.f32 0.5, %v152
      %v154 = vsub.f32 1.5, %v153
      %v155 = vmul.f32 %v150, %v154
      %vm156 = vweird.f32 %v139
      %vm157 = vweird.f32 %v150
      %vm158 = vmor %vm156, %vm157
      %v159 = vsel %vm158, %v150, %v155
      %v160 = vmul.f32 %v126, %v149
      %v161 = vmul.f32 %v127, %v159
      %v162 = vld [vmem:[%s4] sm:$0x1]
      %v164 = vperm.slane %v162, 0
      %v166 = vmul.f32 %v160, %v164
      %v167 = vmul.f32 %v161, %v164
      %v168 = vld [vmem:[%s5] sm:$0x1]
      %v170 = vperm.slane %v168, 0
      %v172 = vadd.f32 %v166, %v170
      %v173 = vadd.f32 %v167, %v170
      %v174 = vpack.c.bf16 %v172, %v172
      %v175 = vpack.c.bf16 %v173, %v173
      %vm176 = vcmask 257024
      %177 = vst.msk [vmem:[%s6] sm:$0xf] %vm176, %v174
      %178 = vst.msk [vmem:[%s6 + $0x4] sm:$0xf] %vm176, %v175
    $region37: #{bert_forward.14} parent=1 // pred_fallthru
      _
    // Predicated region
    $region38: #{bert_forward.14} parent=1 // pred_check
      _
    $region39: #{bert_forward.14} parent=1 // pred_check_branch
      %180 = sbr.rel (0) target = $region41
    $region40: #{bert_forward.14} parent=1 // pred_region
      _
    $region41: #{bert_forward.14} parent=1 // pred_fallthru
      _
    // Predicated region
    $region42: #{bert_forward.14} parent=1 // pred_check
      _
    $region43: #{bert_forward.14} parent=1 // pred_check_branch
      %182 = sbr.rel (0) target = $region45
    $region44: #{bert_forward.14} parent=1 // pred_region
      _
    $region45: #{bert_forward.14} parent=1 // pred_fallthru
      _
    %183 = vsyncpa [#allocation4], 1

// kernel: bert_forward.12
$region0: #{bert_forward.12}
  #allocation0 [shape = 'u32[]', space=smem, size = 0x4, offset = 0x4, fixed_abs, tag = 'smem constant byte address 0x4 - core index']
  #allocation1 [shape = 'u32[72,128]{1,0:T(1,128)}', space=vmem, size = 0x9000, scoped, tag = 'internal scratch']
  #allocation2 [shape = 'f32[16,96]{1,0:T(8,128)}', space=vmem, size = 0x2000, scoped, tag = 'scratch operand']
  %s0 = inlined_call_operand.vmem [shape: bf16[16,32], index: 0, kind: input, shape index: {}]
  %s1 = inlined_call_operand.vmem [shape: bf16[32,96], index: 1, kind: input, shape index: {}]
  %s2 = inlined_call_operand.vmem [shape: f32[1,96], index: 2, kind: input, shape index: {}]
  %s3 = inlined_call_operand.vmem [shape: bf16[16,96], index: 3, kind: output, shape index: {}]
  %s4 = sld [smem:[#allocation0]]
  $region30: #{bert_forward.12} parent=0
    _
  %s6 = ssub.s32 1, %s4
  %s7 = scalar_select 0, %s6, %s4
  // Predicated region
  $region2: #{bert_forward.12} parent=0 // pred_check
    _
  $region3: #{bert_forward.12} parent=0 // pred_check_branch
    %9 = sbr.rel (0) target = $region5
  $region4: #{bert_forward.12} parent=0 // pred_region
    _
  $region5: #{bert_forward.12} parent=0 // pred_fallthru
    _
  // Predicated region
  $region6: #{bert_forward.12} parent=0 // pred_check
    _
  $region7: #{bert_forward.12} parent=0 // pred_check_branch
    %11 = sbr.rel (0) target = $region9
  $region8: #{bert_forward.12} parent=0 // pred_region
    _
  $region9: #{bert_forward.12} parent=0 // pred_fallthru
    _
  // Predicated region
  $region10: #{bert_forward.12} parent=0 // pred_check
    _
  $region11: #{bert_forward.12} parent=0 // pred_check_branch
    %13 = sbr.rel (0) target = $region13
  $region12: #{bert_forward.12} parent=0 // pred_region
    _
  $region13: #{bert_forward.12} parent=0 // pred_fallthru
    _
  %p15 = scmp.eq.s32.totalorder 0, 0
  // Predicated region
  $region14: #{bert_forward.12} parent=0 // pred_check
    %p16 = pneg %p15
  $region15: #{bert_forward.12} parent=0 // pred_check_branch
    %18 = sbr.rel (%p16) target = $region17
  $region16: #{bert_forward.12} parent=0 // pred_region
    %vm19 = vcmask 785408
    %20 = vst.msk [vmem:[#allocation2] sm:$0xff] %vm19, 0.0
    %21 = vst.msk [vmem:[#allocation2 + $0x8] sm:$0xff] %vm19, 0.0
  $region17: #{bert_forward.12} parent=0 // pred_fallthru
    _
  %v22 = vld [vmem:[#allocation2] sm:$0xff]
  %v23 = vld [vmem:[#allocation2 + $0x8] sm:$0xff]
  %v24 = vld [vmem:[%s0] sm:$0xf]
  %v25 = vld [vmem:[%s0 + $0x4] sm:$0xf]
  %v26 = vld [vmem:[%s1] sm:$0xf]
  %v27 = vld [vmem:[%s1 + $0x4] sm:$0xf]
  %v28 = vld [vmem:[%s1 + $0x8] sm:$0xf]
  %v29 = vld [vmem:[%s1 + $0xc] sm:$0xf]
  %v32 = vunpack.c.l.b16 %v24
  %v33 = vunpack.c.l.b16 %v25
  %v34 = vpack.c.b16 %v33, %v32
  %v39 = vunpack.c.l.b16 %v26
  %v40 = vunpack.c.l.b16 %v27
  %v41 = vunpack.c.l.b16 %v28
  %v42 = vunpack.c.l.b16 %v29
  %v43 = vpack.c.b16 %v40, %v39
  %v44 = vpack.c.b16 %v42, %v41
  %vm47 = vcmask 261120
  %v49 = vsel %vm47, %v34, 0
  %51 = vmatpush.bf16.msra.mxu0 0
  %52 = vmatpush.bf16.msra.mxu0 0
  %53 = vmatpush.bf16.msra.mxu0 0
  %54 = vmatpush.bf16.msra.mxu0 0
  %55 = vmatpush.bf16.msra.mxu0 0
  %56 = vmatpush.bf16.msra.mxu0 0
  %57 = vmatpush.bf16.msra.mxu0 %v44
  %58 = vmatpush.bf16.msra.mxu0 %v43
  %59 = vmatmul.bf16.gmra.mxu0 %v49
  %v60 = vpop.f32.mrf.mxu0
  %v61 = vadd.f32 0.0, %v60
  %v62 = vpop.f32.mrf.mxu0
  %v63 = vadd.f32 0.0, %v62
  %64 = vdwg.mxu0
  %v65 = vadd.f32 %v22, %v61
  %v66 = vadd.f32 %v23, %v63
  %vm67 = vcmask 785408
  %68 = vst.msk [vmem:[#allocation2] sm:$0xff] %vm67, %v65
  %69 = vst.msk [vmem:[#allocation2 + $0x8] sm:$0xff] %vm67, %v66
  // Predicated region
  $region18: #{bert_forward.12} parent=0 // pred_check
    %p70 = pneg %p15
  $region19: #{bert_forward.12} parent=0 // pred_check_branch
    %72 = sbr.rel (%p70) target = $region21
  $region20: #{bert_forward.12} parent=0 // pred_region
    %v73 = vld [vmem:[#allocation2] sm:$0xff]
    %v74 = vld [vmem:[#allocation2 + $0x8] sm:$0xff]
    %v75 = vld [vmem:[%s2] sm:$0x1]
    %v77 = vperm.slane %v75, 0
    %v79 = vadd.f32 %v73, %v77
    %v80 = vadd.f32 %v74, %v77
    %v81 = vpack.c.bf16 %v79, %v79
    %v82 = vpack.c.bf16 %v80, %v80
    %vm83 = vcmask 781312
    %84 = vst.msk [vmem:[%s3] sm:$0xf] %vm83, %v81
    %85 = vst.msk [vmem:[%s3 + $0x4] sm:$0xf] %vm83, %v82
  $region21: #{bert_forward.12} parent=0 // pred_fallthru
    _
  // Predicated region
  $region22: #{bert_forward.12} parent=0 // pred_check
    _
  $region23: #{bert_forward.12} parent=0 // pred_check_branch
    %87 = sbr.rel (0) target = $region25
  $region24: #{bert_forward.12} parent=0 // pred_region
    _
  $region25: #{bert_forward.12} parent=0 // pred_fallthru
    _
  // Predicated region
  $region26: #{bert_forward.12} parent=0 // pred_check
    _
  $region27: #{bert_forward.12} parent=0 // pred_check_branch
    %89 = sbr.rel (0) target = $region29
  $region28: #{bert_forward.12} parent=0 // pred_region
    _
  $region29: #{bert_forward.12} parent=0 // pred_fallthru
    _

// kernel: bert_forward.13
$region0: #{bert_forward.13}
  #allocation0 [shape = 'u32[]', space=smem, size = 0x4, offset = 0x4, fixed_abs, tag = 'smem constant byte address 0x4 - core index']
  #allocation1 [shape = 'u32[72,128]{1,0:T(1,128)}', space=vmem, size = 0x9000, scoped, tag = 'internal scratch']
  %s0 = inlined_call_operand.vmem [shape: bf16[2,8,96], index: 0, kind: input, shape index: {}]
  %s1 = inlined_call_operand.vmem [shape: bf16[2,8,32], index: 1, kind: output, shape index: {}]
  %s2 = sld [smem:[#allocation0]]
  $region37: #{bert_forward.13} parent=0
    _
  %s4 = ssub.s32 1, %s2
  %s5 = scalar_select 0, %s4, %s2
  loop: start=0, step=1, limit=4
  $region2: #{bert_forward.13} parent=0 // loop_pre_header
    _
  $region3: #{bert_forward.13} parent=0 // loop_header
    %s7 = sphi 0, %s11
    %p8 = scmp.ge.s32.totalorder %s7, 4
    %s14 = sphi 0, %s26
    %s15 = sphi 0, %s22
    %s16 = sphi 0, %s14
    %s17 = sphi 0, %s15
    %s18 = sphi 0, %s16
    %s19 = sphi 0, %s17
    %s31 = sphi 0, %s33
    %s34 = sphi 0, %s31
    %s35 = sphi 0, %s34
    %s51 = sphi 0, %s35
    %s59 = sphi 0, %s61
    %s62 = sphi 0, %s59
    %s63 = sphi 0, %s62
    %s79 = sphi 0, %s63
  $region4: #{bert_forward.13} parent=0 // loop_header_branch
    %10 = sbr.rel (%p8) target = $region8
  $region5: #{bert_forward.13} parent=0 // loop_body
    %s12 = ssub.s32 %s7, 1
    %s13 = ssub.s32 %s7, 2
    %s20 = sadd.s32 1, %s15
    %p21 = scmp.ge.s32.totalorder %s20, 1
    %s22 = scalar_select %p21, 0, %s20
    %s23 = sadd.s32 1, %s14
    %s24 = scalar_select %p21, %s23, %s14
    %p25 = scmp.ge.s32.totalorder %s24, 2
    %s26 = scalar_select %p25, 0, %s24
    %s27 = ssub.s32 %s14, %s26
    %s28 = ssub.s32 %s15, %s22
    %s29 = sor.u32 %s27, %s28
    %p30 = scmp.eq.s32.totalorder %s29, 0
    %s32 = sadd.s32 %s31, 1
    %s33 = scalar_select %p30, %s31, %s32
    %p36 = pneg %p30
    %p37 = scmp.eq.s32.totalorder %s7, 1
    %p38 = por %p36, %p37
    %p39 = scmp.ne.s32.totalorder %s31, %s34
    %p40 = scmp.eq.s32.totalorder %s7, 0
    %p41 = por %p39, %p40
    %p42 = scmp.ne.s32.totalorder %s31, %s34
    %p43 = scmp.eq.s32.totalorder %s12, 1
    %p44 = por %p42, %p43
    %p45 = scmp.ne.s32.totalorder %s34, %s35
    %p46 = scmp.eq.s32.totalorder %s12, 0
    %p47 = por %p45, %p46
    %p48 = scmp.ne.s32.totalorder %s34, %s35
    %p49 = scmp.eq.s32.totalorder %s13, 1
    %p50 = por %p48, %p49
    %p52 = scmp.ne.s32.totalorder %s35, %s51
    %p53 = scmp.eq.s32.totalorder %s13, 0
    %p54 = por %p52, %p53
    %s55 = ssub.s32 %s14, %s26
    %s56 = ssub.s32 %s15, %s22
    %s57 = sor.u32 %s55, %s56
    %p58 = scmp.eq.s32.totalorder %s57, 0
    %s60 = sadd.s32 %s59, 1
    %s61 = scalar_select %p58, %s59, %s60
    %p64 = pneg %p58
    %p65 = scmp.eq.s32.totalorder %s7, 1
    %p66 = por %p64, %p65
    %p67 = scmp.ne.s32.totalorder %s59, %s62
    %p68 = scmp.eq.s32.totalorder %s7, 0
    %p69 = por %p67, %p68
    %p70 = scmp.ne.s32.totalorder %s59, %s62
    %p71 = scmp.eq.s32.totalorder %s12, 1
    %p72 = por %p70, %p71
    %p73 = scmp.ne.s32.totalorder %s62, %s63
    %p74 = scmp.eq.s32.totalorder %s12, 0
    %p75 = por %p73, %p74
    %p76 = scmp.ne.s32.totalorder %s62, %s63
    %p77 = scmp.eq.s32.totalorder %s13, 1
    %p78 = por %p76, %p77
    %p80 = scmp.ne.s32.totalorder %s63, %s79
    %p81 = scmp.eq.s32.totalorder %s13, 0
    %p82 = por %p80, %p81
    %p83 = scmp.le.s32.totalorder 1, %s7
    %p84 = scmp.lt.s32.totalorder %s7, 3
    %p85 = pnand %p83, %p84
    %p86 = pneg %p85
    // Predicated region
    $region9: #{bert_forward.13} parent=5 // pred_check
      _
    $region10: #{bert_forward.13} parent=5 // pred_check_branch
      %88 = sbr.rel (%p85) target = $region12
    $region11: #{bert_forward.13} parent=5 // pred_region
      %s89 = ssub.s32 %s7, 1
    $region12: #{bert_forward.13} parent=5 // pred_fallthru
      _
    %p90 = scmp.lt.s32.totalorder %s7, 2
    // Predicated region
    $region13: #{bert_forward.13} parent=5 // pred_check
      %p91 = pneg %p90
    $region14: #{bert_forward.13} parent=5 // pred_check_branch
      %93 = sbr.rel (%p91) target = $region16
    $region15: #{bert_forward.13} parent=5 // pred_region
      // Predicated region
      $region17: #{bert_forward.13} parent=15 // pred_check
        %p94 = pneg %p41
      $region18: #{bert_forward.13} parent=15 // pred_check_branch
        %96 = sbr.rel (%p94) target = $region20
      $region19: #{bert_forward.13} parent=15 // pred_region
        %p97 = scmp.lt.s32.totalorder %s14, 1
        %s98 = scalar_select %p97, %s14, 1
        %p99 = scmp.lt.s32.totalorder %s15, 0
        %s100 = scalar_select %p99, %s15, 0
        %s101 = sadd.s32 %s100, %s98
        %s102 = smul.addr %s101, 4
        %s103 = scalar_lea.vmem %s0, %s102
      $region20: #{bert_forward.13} parent=15 // pred_fallthru
        _
    $region16: #{bert_forward.13} parent=5 // pred_fallthru
      _
    %p104 = scmp.le.s32.totalorder 1, %s7
    %p105 = scmp.lt.s32.totalorder %s7, 3
    %p106 = pnand %p104, %p105
    %p107 = pneg %p106
    // Predicated region
    $region21: #{bert_forward.13} parent=5 // pred_check
      _
    $region22: #{bert_forward.13} parent=5 // pred_check_branch
      %109 = sbr.rel (%p106) target = $region24
    $region23: #{bert_forward.13} parent=5 // pred_region
      %s110 = ssub.s32 %s7, 1
      %p111 = scmp.lt.s32.totalorder %s16, 1
      %s112 = scalar_select %p111, %s16, 1
      %p113 = scmp.lt.s32.totalorder %s17, 0
      %s114 = scalar_select %p113, %s17, 0
      %s115 = sadd.s32 %s114, %s112
      %s116 = smul.addr %s115, 4
      %s117 = scalar_lea.vmem %s0, %s116
      %p118 = pneg %p47
      %p119 = pneg %p44
      %p120 = pneg %p75
      %p121 = pneg %p72
      %p122 = scmp.lt.s32.totalorder %s16, 1
      %s123 = scalar_select %p122, %s16, 1
      %p124 = scmp.lt.s32.totalorder %s17, 0
      %s125 = scalar_select %p124, %s17, 0
      %s126 = sadd.s32 %s125, %s123
      %s127 = smul.addr %s126, 4
      %s128 = scalar_lea.vmem %s1, %s127
      %p129 = scmp.lt.s32.totalorder %s16, 1
      %s130 = scalar_select %p129, %s16, 1
      %p131 = scmp.lt.s32.totalorder %s17, 0
      %s132 = scalar_select %p131, %s17, 0
      %s133 = sadd.s32 %s132, %s130
      %s134 = smul.addr %s133, 4
      %s135 = scalar_lea.vmem %s0, %s134
      %p136 = scmp.lt.s32.totalorder %s16, 1
      %s137 = scalar_select %p136, %s16, 1
      %p138 = scmp.lt.s32.totalorder %s17, 0
      %s139 = scalar_select %p138, %s17, 0
      %s140 = sadd.s32 %s139, %s137
      %s141 = smul.addr %s140, 4
      %s142 = scalar_lea.vmem %s1, %s141
      %v144 = vld [vmem:[%s135] sm:$0xf]
      %v145 = vunpack.c.l.bf16 %v144
      %v146 = vmul.f32 %v145, 0.35351563
      %v147 = vpack.c.bf16 %v146, %v146
      %v149 = vunpack.c.l.b16 %v144
      %v150 = vpack.c.b16 %v149, %v149
      %151 = vrot.lane.b32.xlu0 %v150, 120
      %v152 = vpop.permute.xlu0 %151
      %vm153 = vcmask 64512
      %v155 = vsel %vm153, %v147, 0
      %v158 = vsel %vm153, %v152, 0
      %160 = vmatpush.bf16.xpose.msra.mxu0 0
      %161 = vmatpush.bf16.xpose.msra.mxu0 0
      %162 = vmatpush.bf16.xpose.msra.mxu0 0
      %163 = vmatpush.bf16.xpose.msra.mxu0 0
      %164 = vmatpush.bf16.xpose.msra.mxu0 0
      %165 = vmatpush.bf16.xpose.msra.mxu0 0
      %166 = vmatpush.bf16.xpose.msra.mxu0 0
      %167 = vmatpush.bf16.xpose.msra.mxu0 %v158
      %168 = vmatmul.bf16.gmra.mxu0 %v155
      %v169 = vpop.f32.mrf.mxu0
      %v170 = vadd.f32 0.0, %v169
      %v171 = vpop.f32.mrf.mxu0
      %172 = vdwg.mxu0
      %v173 = vsel %vm153, %v170, -inf
      %174 = vmax.xlane.f32.xlu0 %v173
      %v175 = vpop.xlane.xlu0 %174
      %v176 = vsub.f32 %v170, %v175
      %v177 = vmul.f32 %v176, 1.442695
      %v178 = vpow.pop %v177
      %v179 = vsel %vm153, %v178, 0.0
      %180 = vadd.xlane.f32.xlu0 %v179
      %v181 = vpop.xlane.xlu0 %180
      %v182 = vrcp.pop %v181
      %v183 = vmul.f32 %v178, %v182
      %v184 = vpack.c.bf16 %v183, %v183
      %185 = vrot.lane.b32.xlu0 %v150, 112
      %v186 = vpop.permute.xlu0 %185
      %v188 = vsel %vm153, %v184, 0
      %vm190 = vcmask 1043456
      %v192 = vsel %vm190, %v186, 0
      %194 = vmatpush.bf16.msra.mxu0 0
      %195 = vmatpush.bf16.msra.mxu0 0
      %196 = vmatpush.bf16.msra.mxu0 0
      %197 = vmatpush.bf16.msra.mxu0 0
      %198 = vmatpush.bf16.msra.mxu0 0
      %199 = vmatpush.bf16.msra.mxu0 0
      %200 = vmatpush.bf16.msra.mxu0 0
      %201 = vmatpush.bf16.msra.mxu0 %v192
      %202 = vmatmul.bf16.gmra.mxu0 %v188
      %v203 = vpop.f32.mrf.mxu0
      %v204 = vadd.f32 0.0, %v203
      %v205 = vpop.f32.mrf.mxu0
      %206 = vdwg.mxu0
      %v207 = vpack.c.bf16 %v204, %v204
      %vm208 = vcmask 60416
      %209 = vst.msk [vmem:[%s142] sm:$0xf] %vm208, %v207
      %v210 = vld [vmem:[%s135] sm:$0xf]
      %v211 = vunpack.c.l.bf16 %v210
      %v212 = vmul.f32 %v211, 0.35351563
      %v213 = vpack.c.bf16 %v212, %v212
      %215 = vrot.lane.b32.xlu0 %v213, 104
      %v216 = vpop.permute.xlu0 %215
      %v218 = vunpack.c.l.b16 %v210
      %v219 = vpack.c.b16 %v218, %v218
      %220 = vrot.lane.b32.xlu0 %v219, 96
      %v221 = vpop.permute.xlu0 %220
      %v223 = vsel %vm153, %v216, 0
      %v226 = vsel %vm153, %v221, 0
      %228 = vmatpush.bf16.xpose.msra.mxu0 0
      %229 = vmatpush.bf16.xpose.msra.mxu0 0
      %230 = vmatpush.bf16.xpose.msra.mxu0 0
      %231 = vmatpush.bf16.xpose.msra.mxu0 0
      %232 = vmatpush.bf16.xpose.msra.mxu0 0
      %233 = vmatpush.bf16.xpose.msra.mxu0 0
      %234 = vmatpush.bf16.xpose.msra.mxu0 0
      %235 = vmatpush.bf16.xpose.msra.mxu0 %v226
      %236 = vmatmul.bf16.gmra.mxu0 %v223
      %v237 = vpop.f32.mrf.mxu0
      %v238 = vadd.f32 0.0, %v237
      %v239 = vpop.f32.mrf.mxu0
      %240 = vdwg.mxu0
      %v241 = vsel %vm153, %v238, -inf
      %242 = vmax.xlane.f32.xlu0 %v241
      %v243 = vpop.xlane.xlu0 %242
      %v244 = vsub.f32 %v238, %v243
      %v245 = vmul.f32 %v244, 1.442695
      %v246 = vpow.pop %v245
      %v247 = vsel %vm153, %v246, 0.0
      %248 = vadd.xlane.f32.xlu0 %v247
      %v249 = vpop.xlane.xlu0 %248
      %v250 = vrcp.pop %v249
      %v251 = vmul.f32 %v246, %v250
      %v252 = vpack.c.bf16 %v251, %v251
      %253 = vrot.lane.b32.xlu0 %v219, 88
      %v254 = vpop.permute.xlu0 %253
      %v256 = vsel %vm153, %v252, 0
      %v259 = vsel %vm190, %v254, 0
      %261 = vmatpush.bf16.msra.mxu0 0
      %262 = vmatpush.bf16.msra.mxu0 0
      %263 = vmatpush.bf16.msra.mxu0 0
      %264 = vmatpush.bf16.msra.mxu0 0
      %265 = vmatpush.bf16.msra.mxu0 0
      %266 = vmatpush.bf16.msra.mxu0 0
      %267 = vmatpush.bf16.msra.mxu0 0
      %268 = vmatpush.bf16.msra.mxu0 %v259
      %269 = vmatmul.bf16.gmra.mxu0 %v256
      %v270 = vpop.f32.mrf.mxu0
      %v271 = vadd.f32 0.0, %v270
      %v272 = vpop.f32.mrf.mxu0
      %273 = vdwg.mxu0
      %v274 = vpack.c.bf16 %v271, %v271
      %276 = vrot.lane.b32.xlu0 %v274, 8
      %v277 = vpop.permute.xlu0 %276
      %vm279 = vcmask 126016
      %280 = vst.msk [vmem:[%s142] sm:$0xf] %vm279, %v277
      %v281 = vld [vmem:[%s135] sm:$0xf]
      %v282 = vunpack.c.l.bf16 %v281
      %v283 = vmul.f32 %v282, 0.35351563
      %v284 = vpack.c.bf16 %v283, %v283
      %286 = vrot.lane.b32.xlu0 %v284, 80
      %v287 = vpop.permute.xlu0 %286
      %v289 = vunpack.c.l.b16 %v281
      %v290 = vpack.c.b16 %v289, %v289
      %291 = vrot.lane.b32.xlu0 %v290, 72
      %v292 = vpop.permute.xlu0 %291
      %v294 = vsel %vm153, %v287, 0
      %v297 = vsel %vm153, %v292, 0
      %299 = vmatpush.bf16.xpose.msra.mxu0 0
      %300 = vmatpush.bf16.xpose.msra.mxu0 0
      %301 = vmatpush.bf16.xpose.msra.mxu0 0
      %302 = vmatpush.bf16.xpose.msra.mxu0 0
      %303 = vmatpush.bf16.xpose.msra.mxu0 0
      %304 = vmatpush.bf16.xpose.msra.mxu0 0
      %305 = vmatpush.bf16.xpose.msra.mxu0 0
      %306 = vmatpush.bf16.xpose.msra.mxu0 %v297
      %307 = vmatmul.bf16.gmra.mxu0 %v294
      %v308 = vpop.f32.mrf.mxu0
      %v309 = vadd.f32 0.0, %v308
      %v310 = vpop.f32.mrf.mxu0
      %311 = vdwg.mxu0
      %v312 = vsel %vm153, %v309, -inf
      %313 = vmax.xlane.f32.xlu0 %v312
      %v314 = vpop.xlane.xlu0 %313
      %v315 = vsub.f32 %v309, %v314
      %v316 = vmul.f32 %v315, 1.442695
      %v317 = vpow.pop %v316
      %v318 = vsel %vm153, %v317, 0.0
      %319 = vadd.xlane.f32.xlu0 %v318
      %v320 = vpop.xlane.xlu0 %319
      %v321 = vrcp.pop %v320
      %v322 = vmul.f32 %v317, %v321
      %v323 = vpack.c.bf16 %v322, %v322
      %324 = vrot.lane.b32.xlu0 %v290, 64
      %v325 = vpop.permute.xlu0 %324
      %v327 = vsel %vm153, %v323, 0
      %v330 = vsel %vm190, %v325, 0
      %332 = vmatpush.bf16.msra.mxu0 0
      %333 = vmatpush.bf16.msra.mxu0 0
      %334 = vmatpush.bf16.msra.mxu0 0
      %335 = vmatpush.bf16.msra.mxu0 0
      %336 = vmatpush.bf16.msra.mxu0 0
      %337 = vmatpush.bf16.msra.mxu0 0
      %338 = vmatpush.bf16.msra.mxu0 0
      %339 = vmatpush.bf16.msra.mxu0 %v330
      %340 = vmatmul.bf16.gmra.mxu0 %v327
      %v341 = vpop.f32.mrf.mxu0
      %v342 = vadd.f32 0.0, %v341
      %v343 = vpop.f32.mrf.mxu0
      %344 = vdwg.mxu0
      %v345 = vpack.c.bf16 %v342, %v342
      %347 = vrot.lane.b32.xlu0 %v345, 16
      %v348 = vpop.permute.xlu0 %347
      %vm350 = vcmask 191616
      %351 = vst.msk [vmem:[%s142] sm:$0xf] %vm350, %v348
      %v352 = vld [vmem:[%s135] sm:$0xf]
      %v353 = vunpack.c.l.bf16 %v352
      %v354 = vmul.f32 %v353, 0.35351563
      %v355 = vpack.c.bf16 %v354, %v354
      %357 = vrot.lane.b32.xlu0 %v355, 56
      %v358 = vpop.permute.xlu0 %357
      %v360 = vunpack.c.l.b16 %v352
      %v361 = vpack.c.b16 %v360, %v360
      %362 = vrot.lane.b32.xlu0 %v361, 48
      %v363 = vpop.permute.xlu0 %362
      %v365 = vsel %vm153, %v358, 0
      %v368 = vsel %vm153, %v363, 0
      %370 = vmatpush.bf16.xpose.msra.mxu0 0
      %371 = vmatpush.bf16.xpose.msra.mxu0 0
      %372 = vmatpush.bf16.xpose.msra.mxu0 0
      %373 = vmatpush.bf16.xpose.msra.mxu0 0
      %374 = vmatpush.bf16.xpose.msra.mxu0 0
      %375 = vmatpush.bf16.xpose.msra.mxu0 0
      %376 = vmatpush.bf16.xpose.msra.mxu0 0
      %377 = vmatpush.bf16.xpose.msra.mxu0 %v368
      %378 = vmatmul.bf16.gmra.mxu0 %v365
      %v379 = vpop.f32.mrf.mxu0
      %v380 = vadd.f32 0.0, %v379
      %v381 = vpop.f32.mrf.mxu0
      %382 = vdwg.mxu0
      %v383 = vsel %vm153, %v380, -inf
      %384 = vmax.xlane.f32.xlu0 %v383
      %v385 = vpop.xlane.xlu0 %384
      %v386 = vsub.f32 %v380, %v385
      %v387 = vmul.f32 %v386, 1.442695
      %v388 = vpow.pop %v387
      %v389 = vsel %vm153, %v388, 0.0
      %390 = vadd.xlane.f32.xlu0 %v389
      %v391 = vpop.xlane.xlu0 %390
      %v392 = vrcp.pop %v391
      %v393 = vmul.f32 %v388, %v392
      %v394 = vpack.c.bf16 %v393, %v393
      %395 = vrot.lane.b32.xlu0 %v361, 40
      %v396 = vpop.permute.xlu0 %395
      %v398 = vsel %vm153, %v394, 0
      %v401 = vsel %vm190, %v396, 0
      %403 = vmatpush.bf16.msra.mxu0 0
      %404 = vmatpush.bf16.msra.mxu0 0
      %405 = vmatpush.bf16.msra.mxu0 0
      %406 = vmatpush.bf16.msra.mxu0 0
      %407 = vmatpush.bf16.msra.mxu0 0
      %408 = vmatpush.bf16.msra.mxu0 0
      %409 = vmatpush.bf16.msra.mxu0 0
      %410 = vmatpush.bf16.msra.mxu0 %v401
      %411 = vmatmul.bf16.gmra.mxu0 %v398
      %v412 = vpop.f32.mrf.mxu0
      %v413 = vadd.f32 0.0, %v412
      %v414 = vpop.f32.mrf.mxu0
      %415 = vdwg.mxu0
      %v416 = vpack.c.bf16 %v413, %v413
      %418 = vrot.lane.b32.xlu0 %v416, 24
      %v419 = vpop.permute.xlu0 %418
      %vm421 = vcmask 257216
      %422 = vst.msk [vmem:[%s142] sm:$0xf] %vm421, %v419
      %p423 = scmp.lt.s32.totalorder %s16, 1
      %s424 = scalar_select %p423, %s16, 1
      %p425 = scmp.lt.s32.totalorder %s17, 0
      %s426 = scalar_select %p425, %s17, 0
      %s427 = sadd.s32 %s426, %s424
      %s428 = smul.addr %s427, 4
      %s429 = scalar_lea.vmem %s1, %s428
      // Predicated region
      $region25: #{bert_forward.13} parent=23 // pred_check
        %p430 = pneg %p72
      $region26: #{bert_forward.13} parent=23 // pred_check_branch
        %432 = sbr.rel (%p430) target = $region28
      $region27: #{bert_forward.13} parent=23 // pred_region
        _
      $region28: #{bert_forward.13} parent=23 // pred_fallthru
        _
    $region24: #{bert_forward.13} parent=5 // pred_fallthru
      _
    %p433 = scmp.le.s32.totalorder 2, %s7
    // Predicated region
    $region29: #{bert_forward.13} parent=5 // pred_check
      %p434 = pneg %p433
    $region30: #{bert_forward.13} parent=5 // pred_check_branch
      %436 = sbr.rel (%p434) target = $region32
    $region31: #{bert_forward.13} parent=5 // pred_region
      %s437 = ssub.s32 %s7, 2
      // Predicated region
      $region33: #{bert_forward.13} parent=31 // pred_check
        %p438 = pneg %p78
      $region34: #{bert_forward.13} parent=31 // pred_check_branch
        %440 = sbr.rel (%p438) target = $region36
      $region35: #{bert_forward.13} parent=31 // pred_region
        %p441 = scmp.lt.s32.totalorder %s18, 1
        %s442 = scalar_select %p441, %s18, 1
        %p443 = scmp.lt.s32.totalorder %s19, 0
        %s444 = scalar_select %p443, %s19, 0
        %s445 = sadd.s32 %s444, %s442
        %s446 = smul.addr %s445, 4
        %s447 = scalar_lea.vmem %s1, %s446
      $region36: #{bert_forward.13} parent=31 // pred_fallthru
        _
    $region32: #{bert_forward.13} parent=5 // pred_fallthru
      _
  $region6: #{bert_forward.13} parent=0 // loop_footer
    %s11 = sadd.s32 1, %s7
  $region7: #{bert_forward.13} parent=0 // loop_footer_branch
    %6 = sbr.rel target = $region3
  $region8: #{bert_forward.13} parent=0 // loop_exit
    _

// kernel: bert_forward.15
$region0: #{bert_forward.15}
  #allocation0 [shape = 'u32[]', space=smem, size = 0x4, offset = 0x4, fixed_abs, tag = 'smem constant byte address 0x4 - core index']
  #allocation1 [shape = 'u32[72,128]{1,0:T(1,128)}', space=vmem, size = 0x9000, scoped, tag = 'internal scratch']
  #allocation2 [shape = 'f32[16,64]{1,0:T(8,128)}', space=vmem, size = 0x2000, scoped, tag = 'scratch operand']
  %s0 = inlined_call_operand.vmem [shape: bf16[16,32], index: 0, kind: input, shape index: {}]
  %s1 = inlined_call_operand.hbm [shape: bf16[32,64], index: 1, kind: input, shape index: {}]
  %s2 = inlined_call_operand.vmem [shape: f32[1,64], index: 2, kind: input, shape index: {}]
  %s3 = inlined_call_operand.vmem [shape: bf16[16,64], index: 3, kind: output, shape index: {}]
  %s4 = sld [smem:[#allocation0]]
  $region34: #{bert_forward.15} parent=0
    _
  %s6 = ssub.s32 1, %s4
  %s7 = scalar_select 0, %s6, %s4
  $region1: #{bert_forward.15} parent=0
    #allocation3 [shape = 'u8[8192]{0}', space=vmem, size = 0x2000, scoped, tag = 'input window, operand 1, single buffered']
    #allocation4 [shape = 's32[1]{0}', space=sflag, size = 0x4, scoped, tag = 'scoped memory for bert_forward.15']
    %8 = vsyncpa [#allocation4], 0
    // Predicated region
    $region2: #{bert_forward.15} parent=1 // pred_check
      _
    $region3: #{bert_forward.15} parent=1 // pred_check_branch
      %10 = sbr.rel (0) target = $region5
    $region4: #{bert_forward.15} parent=1 // pred_region
      _
    $region5: #{bert_forward.15} parent=1 // pred_fallthru
      _
    // Predicated region
    $region6: #{bert_forward.15} parent=1 // pred_check
      _
    $region7: #{bert_forward.15} parent=1 // pred_check_branch
      %12 = sbr.rel (0) target = $region9
    $region8: #{bert_forward.15} parent=1 // pred_region
      %14 = vsyncadd [#allocation4], 0
      %s15 = sshll.u32 %s1, 4
      %s16 = int_to_ptr.hbm [resolvable:$true] %s15
      %s17 = sshll.u32 [#allocation3], 4
      %s18 = int_to_ptr.vmem [resolvable:$true] %s17
      %23 = dma.hbm_to_vmem [thread:$0]  %s16, 256, %s18, [#allocation4], 64, 64, 4
    $region9: #{bert_forward.15} parent=1 // pred_fallthru
      _
    // Predicated region
    $region10: #{bert_forward.15} parent=1 // pred_check
      _
    $region11: #{bert_forward.15} parent=1 // pred_check_branch
      %25 = sbr.rel (0) target = $region13
    $region12: #{bert_forward.15} parent=1 // pred_region
      _
    $region13: #{bert_forward.15} parent=1 // pred_fallthru
      _
    // Predicated region
    $region14: #{bert_forward.15} parent=1 // pred_check
      _
    $region15: #{bert_forward.15} parent=1 // pred_check_branch
      %27 = sbr.rel (0) target = $region17
    $region16: #{bert_forward.15} parent=1 // pred_region
      %29 = dma.done [#allocation4], 256
    $region17: #{bert_forward.15} parent=1 // pred_fallthru
      _
    %p31 = scmp.eq.s32.totalorder 0, 0
    // Predicated region
    $region18: #{bert_forward.15} parent=1 // pred_check
      %p32 = pneg %p31
    $region19: #{bert_forward.15} parent=1 // pred_check_branch
      %34 = sbr.rel (%p32) target = $region21
    $region20: #{bert_forward.15} parent=1 // pred_region
      %vm35 = vcmask 523264
      %36 = vst.msk [vmem:[#allocation2] sm:$0xff] %vm35, 0.0
      %37 = vst.msk [vmem:[#allocation2 + $0x8] sm:$0xff] %vm35, 0.0
    $region21: #{bert_forward.15} parent=1 // pred_fallthru
      _
    %v38 = vld [vmem:[#allocation2] sm:$0xff]
    %v39 = vld [vmem:[#allocation2 + $0x8] sm:$0xff]
    %v40 = vld [vmem:[%s0] sm:$0xf]
    %v41 = vld [vmem:[%s0 + $0x4] sm:$0xf]
    %v42 = vld [vmem:[#allocation3] sm:$0xf]
    %v43 = vld [vmem:[#allocation3 + $0x4] sm:$0xf]
    %v44 = vld [vmem:[#allocation3 + $0x8] sm:$0xf]
    %v45 = vld [vmem:[#allocation3 + $0xc] sm:$0xf]
    %v48 = vunpack.c.l.b16 %v40
    %v49 = vunpack.c.l.b16 %v41
    %v50 = vpack.c.b16 %v49, %v48
    %v55 = vunpack.c.l.b16 %v42
    %v56 = vunpack.c.l.b16 %v43
    %v57 = vunpack.c.l.b16 %v44
    %v58 = vunpack.c.l.b16 %v45
    %v59 = vpack.c.b16 %v56, %v55
    %v60 = vpack.c.b16 %v58, %v57
    %vm63 = vcmask 261120
    %v65 = vsel %vm63, %v50, 0
    %67 = vmatpush.bf16.msra.mxu0 0
    %68 = vmatpush.bf16.msra.mxu0 0
    %69 = vmatpush.bf16.msra.mxu0 0
    %70 = vmatpush.bf16.msra.mxu0 0
    %71 = vmatpush.bf16.msra.mxu0 0
    %72 = vmatpush.bf16.msra.mxu0 0
    %73 = vmatpush.bf16.msra.mxu0 %v60
    %74 = vmatpush.bf16.msra.mxu0 %v59
    %75 = vmatmul.bf16.gmra.mxu0 %v65
    %v76 = vpop.f32.mrf.mxu0
    %v77 = vadd.f32 0.0, %v76
    %v78 = vpop.f32.mrf.mxu0
    %v79 = vadd.f32 0.0, %v78
    %80 = vdwg.mxu0
    %v81 = vadd.f32 %v38, %v77
    %v82 = vadd.f32 %v39, %v79
    %vm83 = vcmask 523264
    %84 = vst.msk [vmem:[#allocation2] sm:$0xff] %vm83, %v81
    %85 = vst.msk [vmem:[#allocation2 + $0x8] sm:$0xff] %vm83, %v82
    // Predicated region
    $region22: #{bert_forward.15} parent=1 // pred_check
      %p86 = pneg %p31
    $region23: #{bert_forward.15} parent=1 // pred_check_branch
      %88 = sbr.rel (%p86) target = $region25
    $region24: #{bert_forward.15} parent=1 // pred_region
      %v89 = vld [vmem:[#allocation2] sm:$0xff]
      %v90 = vld [vmem:[#allocation2 + $0x8] sm:$0xff]
      %v91 = vld [vmem:[%s2] sm:$0x1]
      %v93 = vperm.slane %v91, 0
      %v95 = vadd.f32 %v89, %v93
      %v96 = vadd.f32 %v90, %v93
      %v97 = vmax.f32 %v95, 0.0
      %v98 = vmax.f32 %v96, 0.0
      %v99 = vpack.c.bf16 %v97, %v97
      %v100 = vpack.c.bf16 %v98, %v98
      %vm101 = vcmask 519168
      %102 = vst.msk [vmem:[%s3] sm:$0xf] %vm101, %v99
      %103 = vst.msk [vmem:[%s3 + $0x4] sm:$0xf] %vm101, %v100
    $region25: #{bert_forward.15} parent=1 // pred_fallthru
      _
    // Predicated region
    $region26: #{bert_forward.15} parent=1 // pred_check
      _
    $region27: #{bert_forward.15} parent=1 // pred_check_branch
      %105 = sbr.rel (0) target = $region29
    $region28: #{bert_forward.15} parent=1 // pred_region
      _
    $region29: #{bert_forward.15} parent=1 // pred_fallthru
      _
    // Predicated region
    $region30: #{bert_forward.15} parent=1 // pred_check
      _
    $region31: #{bert_forward.15} parent=1 // pred_check_branch
      %107 = sbr.rel (0) target = $region33
    $region32: #{bert_forward.15} parent=1 // pred_region
      _
    $region33: #{bert_forward.15} parent=1 // pred_fallthru
      _
    %108 = vsyncpa [#allocation4], 1

// kernel: bert_forward.16
$region0: #{bert_forward.16}
  #allocation0 [shape = 'u32[]', space=smem, size = 0x4, offset = 0x4, fixed_abs, tag = 'smem constant byte address 0x4 - core index']
  #allocation1 [shape = 'u32[72,128]{1,0:T(1,128)}', space=vmem, size = 0x9000, scoped, tag = 'internal scratch']
  #allocation2 [shape = 'f32[16,32]{1,0:T(8,128)}', space=vmem, size = 0x2000, scoped, tag = 'scratch operand']
  %s0 = inlined_call_operand.vmem [shape: bf16[16,64], index: 0, kind: input, shape index: {}]
  %s1 = inlined_call_operand.vmem [shape: bf16[64,32], index: 1, kind: input, shape index: {}]
  %s2 = inlined_call_operand.vmem [shape: f32[1,32], index: 2, kind: input, shape index: {}]
  %s3 = inlined_call_operand.vmem [shape: bf16[16,32], index: 3, kind: input, shape index: {}]
  %s4 = inlined_call_operand.vmem [shape: f32[1,32], index: 4, kind: input, shape index: {}]
  %s5 = inlined_call_operand.vmem [shape: f32[1,32], index: 5, kind: input, shape index: {}]
  %s6 = inlined_call_operand.vmem [shape: bf16[16,32], index: 6, kind: output, shape index: {}]
  %s7 = sld [smem:[#allocation0]]
  $region42: #{bert_forward.16} parent=0
    _
  %s9 = ssub.s32 1, %s7
  %s10 = scalar_select 0, %s9, %s7
  // Predicated region
  $region2: #{bert_forward.16} parent=0 // pred_check
    _
  $region3: #{bert_forward.16} parent=0 // pred_check_branch
    %12 = sbr.rel (0) target = $region5
  $region4: #{bert_forward.16} parent=0 // pred_region
    _
  $region5: #{bert_forward.16} parent=0 // pred_fallthru
    _
  // Predicated region
  $region6: #{bert_forward.16} parent=0 // pred_check
    _
  $region7: #{bert_forward.16} parent=0 // pred_check_branch
    %14 = sbr.rel (0) target = $region9
  $region8: #{bert_forward.16} parent=0 // pred_region
    _
  $region9: #{bert_forward.16} parent=0 // pred_fallthru
    _
  // Predicated region
  $region10: #{bert_forward.16} parent=0 // pred_check
    _
  $region11: #{bert_forward.16} parent=0 // pred_check_branch
    %16 = sbr.rel (0) target = $region13
  $region12: #{bert_forward.16} parent=0 // pred_region
    _
  $region13: #{bert_forward.16} parent=0 // pred_fallthru
    _
  // Predicated region
  $region14: #{bert_forward.16} parent=0 // pred_check
    _
  $region15: #{bert_forward.16} parent=0 // pred_check_branch
    %18 = sbr.rel (0) target = $region17
  $region16: #{bert_forward.16} parent=0 // pred_region
    _
  $region17: #{bert_forward.16} parent=0 // pred_fallthru
    _
  // Predicated region
  $region18: #{bert_forward.16} parent=0 // pred_check
    _
  $region19: #{bert_forward.16} parent=0 // pred_check_branch
    %20 = sbr.rel (0) target = $region21
  $region20: #{bert_forward.16} parent=0 // pred_region
    _
  $region21: #{bert_forward.16} parent=0 // pred_fallthru
    _
  // Predicated region
  $region22: #{bert_forward.16} parent=0 // pred_check
    _
  $region23: #{bert_forward.16} parent=0 // pred_check_branch
    %22 = sbr.rel (0) target = $region25
  $region24: #{bert_forward.16} parent=0 // pred_region
    _
  $region25: #{bert_forward.16} parent=0 // pred_fallthru
    _
  %p24 = scmp.eq.s32.totalorder 0, 0
  // Predicated region
  $region26: #{bert_forward.16} parent=0 // pred_check
    %p25 = pneg %p24
  $region27: #{bert_forward.16} parent=0 // pred_check_branch
    %27 = sbr.rel (%p25) target = $region29
  $region28: #{bert_forward.16} parent=0 // pred_region
    %vm28 = vcmask 261120
    %29 = vst.msk [vmem:[#allocation2] sm:$0xff] %vm28, 0.0
    %30 = vst.msk [vmem:[#allocation2 + $0x8] sm:$0xff] %vm28, 0.0
  $region29: #{bert_forward.16} parent=0 // pred_fallthru
    _
  %v31 = vld [vmem:[#allocation2] sm:$0xff]
  %v32 = vld [vmem:[#allocation2 + $0x8] sm:$0xff]
  %v33 = vld [vmem:[%s0] sm:$0xf]
  %v34 = vld [vmem:[%s0 + $0x4] sm:$0xf]
  %v35 = vld [vmem:[%s1] sm:$0xf]
  %v36 = vld [vmem:[%s1 + $0x4] sm:$0xf]
  %v37 = vld [vmem:[%s1 + $0x8] sm:$0xf]
  %v38 = vld [vmem:[%s1 + $0xc] sm:$0xf]
  %v39 = vld [vmem:[%s1 + $0x10] sm:$0xf]
  %v40 = vld [vmem:[%s1 + $0x14] sm:$0xf]
  %v41 = vld [vmem:[%s1 + $0x18] sm:$0xf]
  %v42 = vld [vmem:[%s1 + $0x1c] sm:$0xf]
  %v45 = vunpack.c.l.b16 %v33
  %v46 = vunpack.c.l.b16 %v34
  %v47 = vpack.c.b16 %v46, %v45
  %v56 = vunpack.c.l.b16 %v35
  %v57 = vunpack.c.l.b16 %v36
  %v58 = vunpack.c.l.b16 %v37
  %v59 = vunpack.c.l.b16 %v38
  %v60 = vunpack.c.l.b16 %v39
  %v61 = vunpack.c.l.b16 %v40
  %v62 = vunpack.c.l.b16 %v41
  %v63 = vunpack.c.l.b16 %v42
  %v64 = vpack.c.b16 %v57, %v56
  %v65 = vpack.c.b16 %v59, %v58
  %v66 = vpack.c.b16 %v61, %v60
  %v67 = vpack.c.b16 %v63, %v62
  %vm72 = vcmask 523264
  %v74 = vsel %vm72, %v47, 0
  %76 = vmatpush.bf16.msra.mxu0 0
  %77 = vmatpush.bf16.msra.mxu0 0
  %78 = vmatpush.bf16.msra.mxu0 0
  %79 = vmatpush.bf16.msra.mxu0 0
  %80 = vmatpush.bf16.msra.mxu0 %v67
  %81 = vmatpush.bf16.msra.mxu0 %v66
  %82 = vmatpush.bf16.msra.mxu0 %v65
  %83 = vmatpush.bf16.msra.mxu0 %v64
  %84 = vmatmul.bf16.gmra.mxu0 %v74
  %v85 = vpop.f32.mrf.mxu0
  %v86 = vadd.f32 0.0, %v85
  %v87 = vpop.f32.mrf.mxu0
  %v88 = vadd.f32 0.0, %v87
  %89 = vdwg.mxu0
  %v90 = vadd.f32 %v31, %v86
  %v91 = vadd.f32 %v32, %v88
  %vm92 = vcmask 261120
  %93 = vst.msk [vmem:[#allocation2] sm:$0xff] %vm92, %v90
  %94 = vst.msk [vmem:[#allocation2 + $0x8] sm:$0xff] %vm92, %v91
  // Predicated region
  $region30: #{bert_forward.16} parent=0 // pred_check
    %p95 = pneg %p24
  $region31: #{bert_forward.16} parent=0 // pred_check_branch
    %97 = sbr.rel (%p95) target = $region33
  $region32: #{bert_forward.16} parent=0 // pred_region
    %v98 = vld [vmem:[#allocation2] sm:$0xff]
    %v99 = vld [vmem:[#allocation2 + $0x8] sm:$0xff]
    %v100 = vld [vmem:[%s2] sm:$0x1]
    %v102 = vperm.slane %v100, 0
    %v104 = vadd.f32 %v98, %v102
    %v105 = vadd.f32 %v99, %v102
    %v106 = vld [vmem:[%s3] sm:$0xf]
    %v107 = vld [vmem:[%s3 + $0x4] sm:$0xf]
    %v108 = vunpack.c.l.bf16 %v106
    %v109 = vunpack.c.l.bf16 %v107
    %v110 = vadd.f32 %v104, %v108
    %v111 = vadd.f32 %v105, %v109
    %v112 = vsel %vm92, %v110, 0.0
    %113 = vadd.xlane.f32.xlu0 %v112
    %v114 = vpop.xlane.xlu0 %113
    %v115 = vsel %vm92, %v111, 0.0
    %116 = vadd.xlane.f32.xlu0 %v115
    %v117 = vpop.xlane.xlu0 %116
    %v118 = vrcp.pop 32.0
    %v119 = vmul.f32 32.0, %v118
    %v120 = vsub.f32 1.0, %v119
    %v121 = vmul.f32 %v118, %v120
    %v122 = vadd.f32 %v118, %v121
    %vm123 = vweird.f32 %v118
    %v124 = vsel %vm123, %v118, %v122
    %v125 = vmul.f32 %v114, %v124
    %v126 = vmul.f32 %v117, %v124
    %v127 = vsub.f32 %v110, %v125
    %v128 = vsub.f32 %v111, %v126
    %v129 = vmul.f32 %v127, %v127
    %v130 = vmul.f32 %v128, %v128
    %v131 = vsel %vm92, %v129, 0.0
    %132 = vadd.xlane.f32.xlu0 %v131
    %v133 = vpop.xlane.xlu0 %132
    %v134 = vsel %vm92, %v130, 0.0
    %135 = vadd.xlane.f32.xlu0 %v134
    %v136 = vpop.xlane.xlu0 %135
    %v137 = vmul.f32 %v133, %v124
    %v138 = vmul.f32 %v136, %v124
    %v139 = vadd.f32 %v137, 0.1
    %v140 = vadd.f32 %v138, 0.1
    %v141 = vrsqrt.pop %v139
    %v142 = vmul.f32 %v141, %v139
    %v143 = vmul.f32 %v142, %v141
    %v144 = vmul.f32 0.5, %v143
    %v145 = vsub.f32 1.5, %v144
    %v146 = vmul.f32 %v141, %v145
    %vm147 = vweird.f32 %v139
    %vm148 = vweird.f32 %v141
    %vm149 = vmor %vm147, %vm148
    %v150 = vsel %vm149, %v141, %v146
    %v151 = vrsqrt.pop %v140
    %v152 = vmul.f32 %v151, %v140
    %v153 = vmul.f32 %v152, %v151
    %v154 = vmul.f32 0.5, %v153
    %v155 = vsub.f32 1.5, %v154
    %v156 = vmul.f32 %v151, %v155
    %vm157 = vweird.f32 %v140
    %vm158 = vweird.f32 %v151
    %vm159 = vmor %vm157, %vm158
    %v160 = vsel %vm159, %v151, %v156
    %v161 = vmul.f32 %v127, %v150
    %v162 = vmul.f32 %v128, %v160
    %v163 = vld [vmem:[%s4] sm:$0x1]
    %v165 = vperm.slane %v163, 0
    %v167 = vmul.f32 %v161, %v165
    %v168 = vmul.f32 %v162, %v165
    %v169 = vld [vmem:[%s5] sm:$0x1]
    %v171 = vperm.slane %v169, 0
    %v173 = vadd.f32 %v167, %v171
    %v174 = vadd.f32 %v168, %v171
    %v175 = vpack.c.bf16 %v173, %v173
    %v176 = vpack.c.bf16 %v174, %v174
    %vm177 = vcmask 257024
    %178 = vst.msk [vmem:[%s6] sm:$0xf] %vm177, %v175
    %179 = vst.msk [vmem:[%s6 + $0x4] sm:$0xf] %vm177, %v176
  $region33: #{bert_forward.16} parent=0 // pred_fallthru
    _
  // Predicated region
  $region34: #{bert_forward.16} parent=0 // pred_check
    _
  $region35: #{bert_forward.16} parent=0 // pred_check_branch
    %181 = sbr.rel (0) target = $region37
  $region36: #{bert_forward.16} parent=0 // pred_region
    _
  $region37: #{bert_forward.16} parent=0 // pred_fallthru
    _
  // Predicated region
  $region38: #{bert_forward.16} parent=0 // pred_check
    _
  $region39: #{bert_forward.16} parent=0 // pred_check_branch
    %183 = sbr.rel (0) target = $region41
  $region40: #{bert_forward.16} parent=0 // pred_region
    _
  $region41: #{bert_forward.16} parent=0 // pred_fallthru
    _

// kernel: bert_forward.22
$region0: #{bert_forward.22}
  #allocation0 [shape = 'u32[]', space=smem, size = 0x4, offset = 0x4, fixed_abs, tag = 'smem constant byte address 0x4 - core index']
  #allocation1 [shape = 'u32[72,128]{1,0:T(1,128)}', space=vmem, size = 0x9000, scoped, tag = 'internal scratch']
  #allocation2 [shape = 'f32[16,32]{1,0:T(8,128)}', space=vmem, size = 0x2000, scoped, tag = 'scratch operand']
  %s0 = inlined_call_operand.vmem [shape: bf16[16,32], index: 0, kind: input, shape index: {}]
  %s1 = inlined_call_operand.vmem [shape: bf16[32,32], index: 1, kind: input, shape index: {}]
  %s2 = inlined_call_operand.vmem [shape: f32[1,32], index: 2, kind: input, shape index: {}]
  %s3 = inlined_call_operand.vmem [shape: bf16[16,32], index: 3, kind: output, shape index: {}]
  %s4 = sld [smem:[#allocation0]]
  $region30: #{bert_forward.22} parent=0
    _
  %s6 = ssub.s32 1, %s4
  %s7 = scalar_select 0, %s6, %s4
  // Predicated region
  $region2: #{bert_forward.22} parent=0 // pred_check
    _
  $region3: #{bert_forward.22} parent=0 // pred_check_branch
    %9 = sbr.rel (0) target = $region5
  $region4: #{bert_forward.22} parent=0 // pred_region
    _
  $region5: #{bert_forward.22} parent=0 // pred_fallthru
    _
  // Predicated region
  $region6: #{bert_forward.22} parent=0 // pred_check
    _
  $region7: #{bert_forward.22} parent=0 // pred_check_branch
    %11 = sbr.rel (0) target = $region9
  $region8: #{bert_forward.22} parent=0 // pred_region
    _
  $region9: #{bert_forward.22} parent=0 // pred_fallthru
    _
  // Predicated region
  $region10: #{bert_forward.22} parent=0 // pred_check
    _
  $region11: #{bert_forward.22} parent=0 // pred_check_branch
    %13 = sbr.rel (0) target = $region13
  $region12: #{bert_forward.22} parent=0 // pred_region
    _
  $region13: #{bert_forward.22} parent=0 // pred_fallthru
    _
  %p15 = scmp.eq.s32.totalorder 0, 0
  // Predicated region
  $region14: #{bert_forward.22} parent=0 // pred_check
    %p16 = pneg %p15
  $region15: #{bert_forward.22} parent=0 // pred_check_branch
    %18 = sbr.rel (%p16) target = $region17
  $region16: #{bert_forward.22} parent=0 // pred_region
    %vm19 = vcmask 261120
    %20 = vst.msk [vmem:[#allocation2] sm:$0xff] %vm19, 0.0
    %21 = vst.msk [vmem:[#allocation2 + $0x8] sm:$0xff] %vm19, 0.0
  $region17: #{bert_forward.22} parent=0 // pred_fallthru
    _
  %v22 = vld [vmem:[#allocation2] sm:$0xff]
  %v23 = vld [vmem:[#allocation2 + $0x8] sm:$0xff]
  %v24 = vld [vmem:[%s0] sm:$0xf]
  %v25 = vld [vmem:[%s0 + $0x4] sm:$0xf]
  %v26 = vld [vmem:[%s1] sm:$0xf]
  %v27 = vld [vmem:[%s1 + $0x4] sm:$0xf]
  %v28 = vld [vmem:[%s1 + $0x8] sm:$0xf]
  %v29 = vld [vmem:[%s1 + $0xc] sm:$0xf]
  %v32 = vunpack.c.l.b16 %v24
  %v33 = vunpack.c.l.b16 %v25
  %v34 = vpack.c.b16 %v33, %v32
  %v39 = vunpack.c.l.b16 %v26
  %v40 = vunpack.c.l.b16 %v27
  %v41 = vunpack.c.l.b16 %v28
  %v42 = vunpack.c.l.b16 %v29
  %v43 = vpack.c.b16 %v40, %v39
  %v44 = vpack.c.b16 %v42, %v41
  %vm47 = vcmask 261120
  %v49 = vsel %vm47, %v34, 0
  %51 = vmatpush.bf16.msra.mxu0 0
  %52 = vmatpush.bf16.msra.mxu0 0
  %53 = vmatpush.bf16.msra.mxu0 0
  %54 = vmatpush.bf16.msra.mxu0 0
  %55 = vmatpush.bf16.msra.mxu0 0
  %56 = vmatpush.bf16.msra.mxu0 0
  %57 = vmatpush.bf16.msra.mxu0 %v44
  %58 = vmatpush.bf16.msra.mxu0 %v43
  %59 = vmatmul.bf16.gmra.mxu0 %v49
  %v60 = vpop.f32.mrf.mxu0
  %v61 = vadd.f32 0.0, %v60
  %v62 = vpop.f32.mrf.mxu0
  %v63 = vadd.f32 0.0, %v62
  %64 = vdwg.mxu0
  %v65 = vadd.f32 %v22, %v61
  %v66 = vadd.f32 %v23, %v63
  %67 = vst.msk [vmem:[#allocation2] sm:$0xff] %vm47, %v65
  %68 = vst.msk [vmem:[#allocation2 + $0x8] sm:$0xff] %vm47, %v66
  // Predicated region
  $region18: #{bert_forward.22} parent=0 // pred_check
    %p69 = pneg %p15
  $region19: #{bert_forward.22} parent=0 // pred_check_branch
    %71 = sbr.rel (%p69) target = $region21
  $region20: #{bert_forward.22} parent=0 // pred_region
    %v72 = vld [vmem:[#allocation2] sm:$0xff]
    %v73 = vld [vmem:[#allocation2 + $0x8] sm:$0xff]
    %v74 = vld [vmem:[%s2] sm:$0x1]
    %v76 = vperm.slane %v74, 0
    %v78 = vadd.f32 %v72, %v76
    %v79 = vadd.f32 %v73, %v76
    %v80 = vtanh.pop %v78
    %v81 = vtanh.pop %v79
    %v82 = vpack.c.bf16 %v80, %v80
    %v83 = vpack.c.bf16 %v81, %v81
    %vm84 = vcmask 257024
    %85 = vst.msk [vmem:[%s3] sm:$0xf] %vm84, %v82
    %86 = vst.msk [vmem:[%s3 + $0x4] sm:$0xf] %vm84, %v83
  $region21: #{bert_forward.22} parent=0 // pred_fallthru
    _
  // Predicated region
  $region22: #{bert_forward.22} parent=0 // pred_check
    _
  $region23: #{bert_forward.22} parent=0 // pred_check_branch
    %88 = sbr.rel (0) target = $region25
  $region24: #{bert_forward.22} parent=0 // pred_region
    _
  $region25: #{bert_forward.22} parent=0 // pred_fallthru
    _
  // Predicated region
  $region26: #{bert_forward.22} parent=0 // pred_check
    _
  $region27: #{bert_forward.22} parent=0 // pred_check_branch
    %90 = sbr.rel (0) target = $region29
  $region28: #{bert_forward.22} parent=0 // pred_region
    _
  $region29: #{bert_forward.22} parent=0 // pred_fallthru
    _

// kernel: bert_forward.19
$region0: #{bert_forward.19}
  #allocation0 [shape = 'u32[]', space=smem, size = 0x4, offset = 0x4, fixed_abs, tag = 'smem constant byte address 0x4 - core index']
  #allocation1 [shape = 'u32[72,128]{1,0:T(1,128)}', space=vmem, size = 0x9000, scoped, tag = 'internal scratch']
  #allocation2 [shape = 'f32[16,32]{1,0:T(8,128)}', space=vmem, size = 0x2000, scoped, tag = 'scratch operand']
  %s0 = inlined_call_operand.vmem [shape: bf16[16,32], index: 0, kind: input, shape index: {}]
  %s1 = inlined_call_operand.vmem [shape: bf16[32,32], index: 1, kind: input, shape index: {}]
  %s2 = inlined_call_operand.vmem [shape: f32[1,32], index: 2, kind: input, shape index: {}]
  %s3 = inlined_call_operand.vmem [shape: bf16[16,32], index: 3, kind: input, shape index: {}]
  %s4 = inlined_call_operand.vmem [shape: f32[1,32], index: 4, kind: input, shape index: {}]
  %s5 = inlined_call_operand.vmem [shape: f32[1,32], index: 5, kind: input, shape index: {}]
  %s6 = inlined_call_operand.vmem [shape: bf16[16,32], index: 6, kind: output, shape index: {}]
  %s7 = sld [smem:[#allocation0]]
  $region42: #{bert_forward.19} parent=0
    _
  %s9 = ssub.s32 1, %s7
  %s10 = scalar_select 0, %s9, %s7
  // Predicated region
  $region2: #{bert_forward.19} parent=0 // pred_check
    _
  $region3: #{bert_forward.19} parent=0 // pred_check_branch
    %12 = sbr.rel (0) target = $region5
  $region4: #{bert_forward.19} parent=0 // pred_region
    _
  $region5: #{bert_forward.19} parent=0 // pred_fallthru
    _
  // Predicated region
  $region6: #{bert_forward.19} parent=0 // pred_check
    _
  $region7: #{bert_forward.19} parent=0 // pred_check_branch
    %14 = sbr.rel (0) target = $region9
  $region8: #{bert_forward.19} parent=0 // pred_region
    _
  $region9: #{bert_forward.19} parent=0 // pred_fallthru
    _
  // Predicated region
  $region10: #{bert_forward.19} parent=0 // pred_check
    _
  $region11: #{bert_forward.19} parent=0 // pred_check_branch
    %16 = sbr.rel (0) target = $region13
  $region12: #{bert_forward.19} parent=0 // pred_region
    _
  $region13: #{bert_forward.19} parent=0 // pred_fallthru
    _
  // Predicated region
  $region14: #{bert_forward.19} parent=0 // pred_check
    _
  $region15: #{bert_forward.19} parent=0 // pred_check_branch
    %18 = sbr.rel (0) target = $region17
  $region16: #{bert_forward.19} parent=0 // pred_region
    _
  $region17: #{bert_forward.19} parent=0 // pred_fallthru
    _
  // Predicated region
  $region18: #{bert_forward.19} parent=0 // pred_check
    _
  $region19: #{bert_forward.19} parent=0 // pred_check_branch
    %20 = sbr.rel (0) target = $region21
  $region20: #{bert_forward.19} parent=0 // pred_region
    _
  $region21: #{bert_forward.19} parent=0 // pred_fallthru
    _
  // Predicated region
  $region22: #{bert_forward.19} parent=0 // pred_check
    _
  $region23: #{bert_forward.19} parent=0 // pred_check_branch
    %22 = sbr.rel (0) target = $region25
  $region24: #{bert_forward.19} parent=0 // pred_region
    _
  $region25: #{bert_forward.19} parent=0 // pred_fallthru
    _
  %p24 = scmp.eq.s32.totalorder 0, 0
  // Predicated region
  $region26: #{bert_forward.19} parent=0 // pred_check
    %p25 = pneg %p24
  $region27: #{bert_forward.19} parent=0 // pred_check_branch
    %27 = sbr.rel (%p25) target = $region29
  $region28: #{bert_forward.19} parent=0 // pred_region
    %vm28 = vcmask 261120
    %29 = vst.msk [vmem:[#allocation2] sm:$0xff] %vm28, 0.0
    %30 = vst.msk [vmem:[#allocation2 + $0x8] sm:$0xff] %vm28, 0.0
  $region29: #{bert_forward.19} parent=0 // pred_fallthru
    _
  %v31 = vld [vmem:[#allocation2] sm:$0xff]
  %v32 = vld [vmem:[#allocation2 + $0x8] sm:$0xff]
  %v33 = vld [vmem:[%s0] sm:$0xf]
  %v34 = vld [vmem:[%s0 + $0x4] sm:$0xf]
  %v35 = vld [vmem:[%s1] sm:$0xf]
  %v36 = vld [vmem:[%s1 + $0x4] sm:$0xf]
  %v37 = vld [vmem:[%s1 + $0x8] sm:$0xf]
  %v38 = vld [vmem:[%s1 + $0xc] sm:$0xf]
  %v41 = vunpack.c.l.b16 %v33
  %v42 = vunpack.c.l.b16 %v34
  %v43 = vpack.c.b16 %v42, %v41
  %v48 = vunpack.c.l.b16 %v35
  %v49 = vunpack.c.l.b16 %v36
  %v50 = vunpack.c.l.b16 %v37
  %v51 = vunpack.c.l.b16 %v38
  %v52 = vpack.c.b16 %v49, %v48
  %v53 = vpack.c.b16 %v51, %v50
  %vm56 = vcmask 261120
  %v58 = vsel %vm56, %v43, 0
  %60 = vmatpush.bf16.msra.mxu0 0
  %61 = vmatpush.bf16.msra.mxu0 0
  %62 = vmatpush.bf16.msra.mxu0 0
  %63 = vmatpush.bf16.msra.mxu0 0
  %64 = vmatpush.bf16.msra.mxu0 0
  %65 = vmatpush.bf16.msra.mxu0 0
  %66 = vmatpush.bf16.msra.mxu0 %v53
  %67 = vmatpush.bf16.msra.mxu0 %v52
  %68 = vmatmul.bf16.gmra.mxu0 %v58
  %v69 = vpop.f32.mrf.mxu0
  %v70 = vadd.f32 0.0, %v69
  %v71 = vpop.f32.mrf.mxu0
  %v72 = vadd.f32 0.0, %v71
  %73 = vdwg.mxu0
  %v74 = vadd.f32 %v31, %v70
  %v75 = vadd.f32 %v32, %v72
  %76 = vst.msk [vmem:[#allocation2] sm:$0xff] %vm56, %v74
  %77 = vst.msk [vmem:[#allocation2 + $0x8] sm:$0xff] %vm56, %v75
  // Predicated region
  $region30: #{bert_forward.19} parent=0 // pred_check
    %p78 = pneg %p24
  $region31: #{bert_forward.19} parent=0 // pred_check_branch
    %80 = sbr.rel (%p78) target = $region33
  $region32: #{bert_forward.19} parent=0 // pred_region
    %v81 = vld [vmem:[#allocation2] sm:$0xff]
    %v82 = vld [vmem:[#allocation2 + $0x8] sm:$0xff]
    %v83 = vld [vmem:[%s2] sm:$0x1]
    %v85 = vperm.slane %v83, 0
    %v87 = vadd.f32 %v81, %v85
    %v88 = vadd.f32 %v82, %v85
    %v89 = vld [vmem:[%s3] sm:$0xf]
    %v90 = vld [vmem:[%s3 + $0x4] sm:$0xf]
    %v91 = vunpack.c.l.bf16 %v89
    %v92 = vunpack.c.l.bf16 %v90
    %v93 = vadd.f32 %v87, %v91
    %v94 = vadd.f32 %v88, %v92
    %v95 = vsel %vm56, %v93, 0.0
    %96 = vadd.xlane.f32.xlu0 %v95
    %v97 = vpop.xlane.xlu0 %96
    %v98 = vsel %vm56, %v94, 0.0
    %99 = vadd.xlane.f32.xlu0 %v98
    %v100 = vpop.xlane.xlu0 %99
    %v101 = vrcp.pop 32.0
    %v102 = vmul.f32 32.0, %v101
    %v103 = vsub.f32 1.0, %v102
    %v104 = vmul.f32 %v101, %v103
    %v105 = vadd.f32 %v101, %v104
    %vm106 = vweird.f32 %v101
    %v107 = vsel %vm106, %v101, %v105
    %v108 = vmul.f32 %v97, %v107
    %v109 = vmul.f32 %v100, %v107
    %v110 = vsub.f32 %v93, %v108
    %v111 = vsub.f32 %v94, %v109
    %v112 = vmul.f32 %v110, %v110
    %v113 = vmul.f32 %v111, %v111
    %v114 = vsel %vm56, %v112, 0.0
    %115 = vadd.xlane.f32.xlu0 %v114
    %v116 = vpop.xlane.xlu0 %115
    %v117 = vsel %vm56, %v113, 0.0
    %118 = vadd.xlane.f32.xlu0 %v117
    %v119 = vpop.xlane.xlu0 %118
    %v120 = vmul.f32 %v116, %v107
    %v121 = vmul.f32 %v119, %v107
    %v122 = vadd.f32 %v120, 0.1
    %v123 = vadd.f32 %v121, 0.1
    %v124 = vrsqrt.pop %v122
    %v125 = vmul.f32 %v124, %v122
    %v126 = vmul.f32 %v125, %v124
    %v127 = vmul.f32 0.5, %v126
    %v128 = vsub.f32 1.5, %v127
    %v129 = vmul.f32 %v124, %v128
    %vm130 = vweird.f32 %v122
    %vm131 = vweird.f32 %v124
    %vm132 = vmor %vm130, %vm131
    %v133 = vsel %vm132, %v124, %v129
    %v134 = vrsqrt.pop %v123
    %v135 = vmul.f32 %v134, %v123
    %v136 = vmul.f32 %v135, %v134
    %v137 = vmul.f32 0.5, %v136
    %v138 = vsub.f32 1.5, %v137
    %v139 = vmul.f32 %v134, %v138
    %vm140 = vweird.f32 %v123
    %vm141 = vweird.f32 %v134
    %vm142 = vmor %vm140, %vm141
    %v143 = vsel %vm142, %v134, %v139
    %v144 = vmul.f32 %v110, %v133
    %v145 = vmul.f32 %v111, %v143
    %v146 = vld [vmem:[%s4] sm:$0x1]
    %v148 = vperm.slane %v146, 0
    %v150 = vmul.f32 %v144, %v148
    %v151 = vmul.f32 %v145, %v148
    %v152 = vld [vmem:[%s5] sm:$0x1]
    %v154 = vperm.slane %v152, 0
    %v156 = vadd.f32 %v150, %v154
    %v157 = vadd.f32 %v151, %v154
    %v158 = vpack.c.bf16 %v156, %v156
    %v159 = vpack.c.bf16 %v157, %v157
    %vm160 = vcmask 257024
    %161 = vst.msk [vmem:[%s6] sm:$0xf] %vm160, %v158
    %162 = vst.msk [vmem:[%s6 + $0x4] sm:$0xf] %vm160, %v159
  $region33: #{bert_forward.19} parent=0 // pred_fallthru
    _
  // Predicated region
  $region34: #{bert_forward.19} parent=0 // pred_check
    _
  $region35: #{bert_forward.19} parent=0 // pred_check_branch
    %164 = sbr.rel (0) target = $region37
  $region36: #{bert_forward.19} parent=0 // pred_region
    _
  $region37: #{bert_forward.19} parent=0 // pred_fallthru
    _
  // Predicated region
  $region38: #{bert_forward.19} parent=0 // pred_check
    _
  $region39: #{bert_forward.19} parent=0 // pred_check_branch
    %166 = sbr.rel (0) target = $region41
  $region40: #{bert_forward.19} parent=0 // pred_region
    _
  $region41: #{bert_forward.19} parent=0 // pred_fallthru
    _

// kernel: bert_forward.23
$region0: #{bert_forward.23}
  #allocation0 [shape = 'u32[]', space=smem, size = 0x4, offset = 0x4, fixed_abs, tag = 'smem constant byte address 0x4 - core index']
  #allocation1 [shape = 'u32[72,128]{1,0:T(1,128)}', space=vmem, size = 0x9000, scoped, tag = 'internal scratch']
  #allocation2 [shape = 'f32[16,48]{1,0:T(8,128)}', space=vmem, size = 0x2000, scoped, tag = 'scratch operand']
  %s0 = inlined_call_operand.vmem [shape: bf16[16,32], index: 0, kind: input, shape index: {}]
  %s1 = inlined_call_operand.vmem [shape: bf16[32,48], index: 1, kind: input, shape index: {}]
  %s2 = inlined_call_operand.vmem [shape: f32[1,48], index: 2, kind: input, shape index: {}]
  %s3 = inlined_call_operand.hbm [shape: f32[16,48], index: 3, kind: output, shape index: {}]
  %s4 = sld [smem:[#allocation0]]
  $region30: #{bert_forward.23} parent=0
    _
  %s6 = ssub.s32 1, %s4
  %s7 = scalar_select 0, %s6, %s4
  $region1: #{bert_forward.23} parent=0
    #allocation3 [shape = 'u8[8192]{0}', space=vmem, size = 0x2000, scoped, tag = 'output window, operand 0, single buffered']
    #allocation4 [shape = 's32[1]{0}', space=sflag, size = 0x4, scoped, tag = 'scoped memory for bert_forward.23']
    %8 = vsyncpa [#allocation4], 0
    // Predicated region
    $region2: #{bert_forward.23} parent=1 // pred_check
      _
    $region3: #{bert_forward.23} parent=1 // pred_check_branch
      %10 = sbr.rel (0) target = $region5
    $region4: #{bert_forward.23} parent=1 // pred_region
      _
    $region5: #{bert_forward.23} parent=1 // pred_fallthru
      _
    // Predicated region
    $region6: #{bert_forward.23} parent=1 // pred_check
      _
    $region7: #{bert_forward.23} parent=1 // pred_check_branch
      %12 = sbr.rel (0) target = $region9
    $region8: #{bert_forward.23} parent=1 // pred_region
      _
    $region9: #{bert_forward.23} parent=1 // pred_fallthru
      _
    // Predicated region
    $region10: #{bert_forward.23} parent=1 // pred_check
      _
    $region11: #{bert_forward.23} parent=1 // pred_check_branch
      %14 = sbr.rel (0) target = $region13
    $region12: #{bert_forward.23} parent=1 // pred_region
      _
    $region13: #{bert_forward.23} parent=1 // pred_fallthru
      _
    %p16 = scmp.eq.s32.totalorder 0, 0
    // Predicated region
    $region14: #{bert_forward.23} parent=1 // pred_check
      %p17 = pneg %p16
    $region15: #{bert_forward.23} parent=1 // pred_check_branch
      %19 = sbr.rel (%p17) target = $region17
    $region16: #{bert_forward.23} parent=1 // pred_region
      %vm20 = vcmask 392192
      %21 = vst.msk [vmem:[#allocation2] sm:$0xff] %vm20, 0.0
      %22 = vst.msk [vmem:[#allocation2 + $0x8] sm:$0xff] %vm20, 0.0
    $region17: #{bert_forward.23} parent=1 // pred_fallthru
      _
    %v23 = vld [vmem:[#allocation2] sm:$0xff]
    %v24 = vld [vmem:[#allocation2 + $0x8] sm:$0xff]
    %v25 = vld [vmem:[%s0] sm:$0xf]
    %v26 = vld [vmem:[%s0 + $0x4] sm:$0xf]
    %v27 = vld [vmem:[%s1] sm:$0xf]
    %v28 = vld [vmem:[%s1 + $0x4] sm:$0xf]
    %v29 = vld [vmem:[%s1 + $0x8] sm:$0xf]
    %v30 = vld [vmem:[%s1 + $0xc] sm:$0xf]
    %v33 = vunpack.c.l.b16 %v25
    %v34 = vunpack.c.l.b16 %v26
    %v35 = vpack.c.b16 %v34, %v33
    %v40 = vunpack.c.l.b16 %v27
    %v41 = vunpack.c.l.b16 %v28
    %v42 = vunpack.c.l.b16 %v29
    %v43 = vunpack.c.l.b16 %v30
    %v44 = vpack.c.b16 %v41, %v40
    %v45 = vpack.c.b16 %v43, %v42
    %vm48 = vcmask 261120
    %v50 = vsel %vm48, %v35, 0
    %52 = vmatpush.bf16.msra.mxu0 0
    %53 = vmatpush.bf16.msra.mxu0 0
    %54 = vmatpush.bf16.msra.mxu0 0
    %55 = vmatpush.bf16.msra.mxu0 0
    %56 = vmatpush.bf16.msra.mxu0 0
    %57 = vmatpush.bf16.msra.mxu0 0
    %58 = vmatpush.bf16.msra.mxu0 %v45
    %59 = vmatpush.bf16.msra.mxu0 %v44
    %60 = vmatmul.bf16.gmra.mxu0 %v50
    %v61 = vpop.f32.mrf.mxu0
    %v62 = vadd.f32 0.0, %v61
    %v63 = vpop.f32.mrf.mxu0
    %v64 = vadd.f32 0.0, %v63
    %65 = vdwg.mxu0
    %v66 = vadd.f32 %v23, %v62
    %v67 = vadd.f32 %v24, %v64
    %vm68 = vcmask 392192
    %69 = vst.msk [vmem:[#allocation2] sm:$0xff] %vm68, %v66
    %70 = vst.msk [vmem:[#allocation2 + $0x8] sm:$0xff] %vm68, %v67
    // Predicated region
    $region18: #{bert_forward.23} parent=1 // pred_check
      %p71 = pneg %p16
    $region19: #{bert_forward.23} parent=1 // pred_check_branch
      %73 = sbr.rel (%p71) target = $region21
    $region20: #{bert_forward.23} parent=1 // pred_region
      %v74 = vld [vmem:[#allocation2] sm:$0xff]
      %v75 = vld [vmem:[#allocation2 + $0x8] sm:$0xff]
      %v76 = vld [vmem:[%s2] sm:$0x1]
      %v78 = vperm.slane %v76, 0
      %v80 = vadd.f32 %v74, %v78
      %v81 = vadd.f32 %v75, %v78
      %82 = vst.msk [vmem:[#allocation3] sm:$0xff] %vm68, %v80
      %83 = vst.msk [vmem:[#allocation3 + $0x8] sm:$0xff] %vm68, %v81
    $region21: #{bert_forward.23} parent=1 // pred_fallthru
      _
    // Predicated region
    $region22: #{bert_forward.23} parent=1 // pred_check
      _
    $region23: #{bert_forward.23} parent=1 // pred_check_branch
      %85 = sbr.rel (0) target = $region25
    $region24: #{bert_forward.23} parent=1 // pred_region
      %87 = vsyncadd [#allocation4], 0
      %s88 = sshll.u32 [#allocation3], 4
      %s89 = int_to_ptr.vmem [resolvable:$true] %s88
      %s90 = sshll.u32 %s3, 4
      %s91 = int_to_ptr.hbm [resolvable:$true] %s90
      %96 = dma.vmem_to_hbm [thread:$0]  %s89, 256, %s91, [#allocation4], 128, 128, 8
    $region25: #{bert_forward.23} parent=1 // pred_fallthru
      _
    // Predicated region
    $region26: #{bert_forward.23} parent=1 // pred_check
      _
    $region27: #{bert_forward.23} parent=1 // pred_check_branch
      %98 = sbr.rel (0) target = $region29
    $region28: #{bert_forward.23} parent=1 // pred_region
      %100 = dma.done [#allocation4], 256
    $region29: #{bert_forward.23} parent=1 // pred_fallthru
      _
    %101 = vsyncpa [#allocation4], 1

</llo_original>
